<compile_context>
chip_gen: v7x
topology: tpu7x:2x2x1
jax: 0.10.0
libtpu: 0.0.40
codegen_flags: <defaults>
</compile_context>

<pallas_src>
import math

import jax
import jax.numpy as jnp
from jax.experimental import pallas as pl
from jax.experimental.pallas import tpu as pltpu


def _linear_kernel(x_ref, w_ref, b_ref, o_ref):
    # x_ref: (tm, K) f32 row block
    # w_ref: (K, N)  bf16, resident (constant index_map, single-buffered)
    # b_ref: (1, N)  f32, resident
    # o_ref: (tm, N) f32
    x = x_ref[...].astype(w_ref.dtype)  # in-kernel cast keeps wrapper free of extra passes
    o_ref[...] = (
        jnp.dot(x, w_ref[...], preferred_element_type=jnp.float32) + b_ref[...]
    ).astype(o_ref.dtype)


def linear_pallas(x, w_t, b, *, tm=512):
    """x: (..., K) float32, w_t: (K, N) (pre-transposed, typically bf16), b: (N,) float32."""
    K, N = w_t.shape
    lead = x.shape[:-1]
    M = math.prod(lead) if lead else 1

    x2 = x.reshape(M, K)
    b2 = b.reshape(1, N).astype(jnp.float32)

    # Clamp the row tile to the problem size. tm is either the full M (allowed even if
    # not a multiple of 8) or the default 512 (a multiple of 8); ragged last blocks are
    # handled by the cdiv grid with masked stores.
    tm = min(tm, max(M, 1))
    grid = (pl.cdiv(M, tm),)

    cost = pl.CostEstimate(
        flops=2 * M * K * N,
        transcendentals=0,
        bytes_accessed=(
            M * K * x2.dtype.itemsize
            + K * N * w_t.dtype.itemsize
            + N * 4
            + M * N * 4
        ),
    )

    out = pl.pallas_call(
        _linear_kernel,
        out_shape=jax.ShapeDtypeStruct((M, N), x.dtype),
        grid_spec=pltpu.PrefetchScalarGridSpec(
            num_scalar_prefetch=0,
            grid=grid,
            in_specs=[
                # Activation row block: double-buffered (default) along the M grid axis.
                pl.BlockSpec((tm, K), lambda i: (i, 0)),
                # Full weight, resident: constant index_map -> DMA'd once; single buffer.
                pl.BlockSpec((K, N), lambda i: (0, 0), pipeline_mode=pl.Buffered(1)),
                # Full bias, resident.
                pl.BlockSpec((1, N), lambda i: (0, 0), pipeline_mode=pl.Buffered(1)),
            ],
            out_specs=pl.BlockSpec((tm, N), lambda i: (i, 0)),
        ),
        compiler_params=pltpu.CompilerParams(
            # Single M grid axis; "parallel" lets v7x shard row blocks across its 2 TCs.
            dimension_semantics=("parallel",),
        ),
        cost_estimate=cost,
    )(x2, w_t, b2)

    return out.reshape(*lead, N)


def init_params(key, in_features=1024, out_features=768):
    # Deterministic init mimicking nn.Linear's uniform(-1/sqrt(fan_in), 1/sqrt(fan_in)).
    kw, kb = jax.random.split(key)
    bound = 1.0 / jnp.sqrt(jnp.float32(in_features))
    W = jax.random.uniform(
        kw, (out_features, in_features), jnp.float32, minval=-bound, maxval=bound
    )
    b = jax.random.uniform(
        kb, (out_features,), jnp.float32, minval=-bound, maxval=bound
    )
    return W, b


if __name__ == "__main__":
    key = jax.random.PRNGKey(0)
    k_in, k_param = jax.random.split(key)

    # Small input consistent with the forward: img of shape (batch, seq, 1024).
    batch, seq, in_features, out_features = 2, 8, 1024, 768
    img = jax.random.normal(k_in, (batch, seq, in_features), jnp.float32)

    W, b = init_params(k_param, in_features, out_features)
    # Pre-transpose and cast to bf16 once at init (kept out of the per-call path).
    w_t = jnp.asarray(W.T, dtype=jnp.bfloat16)  # (K, N)

    y = linear_pallas(img, w_t, b)
    y = jax.block_until_ready(y)

    # Reference check against plain JAX f32 (same semantics as torch nn.Linear).
    # Tolerance loosened to cover bf16 weight/activation rounding over K=1024.
    y_ref = img @ W.T + b
    assert y.shape == (batch, seq, out_features)
    assert jnp.allclose(y, y_ref, atol=2e-2, rtol=2e-2)

    print("KERNEL_OK")
</pallas_src>

<mosaic_0001>
module attributes {stable_mosaic.version = 11 : i64} {
  func.func @_linear_kernel(%arg0: i32, %arg1: memref<16x1024xf32, #tpu.memory_space<vmem>>, %arg2: memref<1024x768xbf16, #tpu.memory_space<vmem>>, %arg3: memref<1x768xf32, #tpu.memory_space<vmem>>, %arg4: memref<16x768xf32, #tpu.memory_space<vmem>>) attributes {dimension_semantics = [#tpu.dimension_semantics<parallel>], iteration_bounds = array<i64: 1>, scalar_prefetch = 0 : i64, scratch_operands = 0 : i64, tpu.core_type = #tpu.core_type<tc>, window_params = [{transform_indices = @transform_0, window_bounds = array<i64: 16, 1024>}, {pipeline_mode = #tpu.pipeline_mode<synchronous>, transform_indices = @transform_1, window_bounds = array<i64: 1024, 768>}, {pipeline_mode = #tpu.pipeline_mode<synchronous>, transform_indices = @transform_2, window_bounds = array<i64: 1, 768>}, {transform_indices = @transform_3, window_bounds = array<i64: 16, 768>}]} {
    %c0 = arith.constant 0 : index
    %c0_0 = arith.constant 0 : index
    %0 = vector.load %arg1[%c0, %c0_0] : memref<16x1024xf32, #tpu.memory_space<vmem>>, vector<16x1024xf32>
    %1 = arith.truncf %0 : vector<16x1024xf32> to vector<16x1024xbf16>
    %c0_1 = arith.constant 0 : index
    %c0_2 = arith.constant 0 : index
    %2 = vector.load %arg2[%c0_1, %c0_2] : memref<1024x768xbf16, #tpu.memory_space<vmem>>, vector<1024x768xbf16>
    %cst = arith.constant dense<0.000000e+00> : vector<16x768xf32>
    %3 = tpu.matmul %1, %2, %cst {dimension_numbers = #tpu.dot_dimension_numbers<[1], [0], [0], [1], [0, 0, 1, 1], [], []>} : vector<16x1024xbf16>, vector<1024x768xbf16>, vector<16x768xf32> -> vector<16x768xf32>
    %c0_3 = arith.constant 0 : index
    %c0_4 = arith.constant 0 : index
    %4 = vector.load %arg3[%c0_3, %c0_4] : memref<1x768xf32, #tpu.memory_space<vmem>>, vector<1x768xf32>
    %5 = vector.broadcast %4 : vector<1x768xf32> to vector<16x768xf32>
    %6 = arith.addf %3, %5 : vector<16x768xf32>
    %c0_5 = arith.constant 0 : index
    %c0_6 = arith.constant 0 : index
    %7 = vector.load %arg4[%c0_5, %c0_6] : memref<16x768xf32, #tpu.memory_space<vmem>>, vector<16x768xf32>
    tpu.vector_store %arg4[%c0_5, %c0_6], %6 {strides = array<i32>} : memref<16x768xf32, #tpu.memory_space<vmem>>, vector<16x768xf32>,
    return
  }
  func.func @transform_0(%arg0: i32) -> (i32, i32) {
    %c0_i32 = arith.constant 0 : i32
    %c0_i32_0 = arith.constant 0 : i32
    return %arg0, %c0_i32 : i32, i32
  }
  func.func @transform_1(%arg0: i32) -> (i32, i32) {
    %c0_i32 = arith.constant 0 : i32
    %c0_i32_0 = arith.constant 0 : i32
    %c0_i32_1 = arith.constant 0 : i32
    return %c0_i32, %c0_i32_0 : i32, i32
  }
  func.func @transform_2(%arg0: i32) -> (i32, i32) {
    %c0_i32 = arith.constant 0 : i32
    %c0_i32_0 = arith.constant 0 : i32
    %c0_i32_1 = arith.constant 0 : i32
    return %c0_i32, %c0_i32_0 : i32, i32
  }
  func.func @transform_3(%arg0: i32) -> (i32, i32) {
    %c0_i32 = arith.constant 0 : i32
    %c0_i32_0 = arith.constant 0 : i32
    return %arg0, %c0_i32 : i32, i32
  }
}

</mosaic_0001>

<llo_original>
// kernel: tpu_custom_call.1
$region0: #{tpu_custom_call.1}
  #allocation0 [shape = 'u32[]', space=smem, size = 0x4, offset = 0x4, fixed_abs, tag = 'smem constant byte address 0x4 - core index']
  #allocation1 [shape = 'u32[144,128]{1,0:T(1,128)}', space=vmem, size = 0x12000, scoped, tag = 'internal scratch']
  %s0 = inlined_call_operand.hbm [shape: f32[16,1024], index: 0, kind: input, shape index: {}]
  %s1 = inlined_call_operand.hbm [shape: bf16[1024,768], index: 1, kind: input, shape index: {}]
  %s2 = inlined_call_operand.hbm [shape: f32[1,768], index: 2, kind: input, shape index: {}]
  %s3 = inlined_call_operand.hbm [shape: f32[16,768], index: 3, kind: output, shape index: {}]
  %s4 = sld [smem:[#allocation0]]
  $region34: #{tpu_custom_call.1} parent=0
    _
  %s6 = ssub.s32 1, %s4
  %s7 = scalar_select 0, %s6, %s4
  $region1: #{tpu_custom_call.1} parent=0
    #allocation2 [shape = 'u8[65536]{0}', space=vmem, size = 0x10000, scoped, tag = 'input window, operand 0, single buffered']
    #allocation3 [shape = 's32[1]{0}', space=sflag, size = 0x4, scoped, tag = 'scoped memory for tpu_custom_call.1']
    #allocation4 [shape = 's32[1]{0}', space=sflag, size = 0x4, scoped, tag = 'scoped memory for tpu_custom_call.1']
    #allocation5 [shape = 'u8[1572864]{0}', space=vmem, size = 0x180000, scoped, tag = 'input window, operand 1, single buffered']
    #allocation6 [shape = 's32[1]{0}', space=sflag, size = 0x4, scoped, tag = 'scoped memory for tpu_custom_call.1']
    #allocation7 [shape = 'u8[3072]{0}', space=vmem, size = 0xc00, scoped, tag = 'input window, operand 2, single buffered']
    #allocation8 [shape = 'u8[49152]{0}', space=vmem, size = 0xc000, scoped, tag = 'output window, operand 0, single buffered']
    %8 = vsyncpa [#allocation3], 0
    %9 = vsyncpa [#allocation6], 0
    %10 = vsyncpa [#allocation4], 0
    // Predicated region
    $region2: #{tpu_custom_call.1} parent=1 // pred_check
      _
    $region3: #{tpu_custom_call.1} parent=1 // pred_check_branch
      %12 = sbr.rel (0) target = $region5
    $region4: #{tpu_custom_call.1} parent=1 // pred_region
      %s14 = ssub.s32 2048, 2048
      %15 = vsyncadd [#allocation3], %s14
      %s16 = sshll.u32 [#allocation2], 4
      %s17 = int_to_ptr.vmem [resolvable:$true] %s16
      %22 = dma.hbm_to_vmem [thread:$0]  %s0, 2048, %s17, [#allocation3], 1024, 1024, 64
    $region5: #{tpu_custom_call.1} parent=1 // pred_fallthru
      _
    // Predicated region
    $region6: #{tpu_custom_call.1} parent=1 // pred_check
      _
    $region7: #{tpu_custom_call.1} parent=1 // pred_check_branch
      %24 = sbr.rel (0) target = $region9
    $region8: #{tpu_custom_call.1} parent=1 // pred_region
      %s26 = ssub.s32 49152, 49152
      %27 = vsyncadd [#allocation6], %s26
      %s28 = sshll.u32 [#allocation5], 4
      %s29 = int_to_ptr.vmem [resolvable:$true] %s28
      %34 = dma.hbm_to_vmem [thread:$0]  %s1, 49152, %s29, [#allocation6], 384, 384, 24
    $region9: #{tpu_custom_call.1} parent=1 // pred_fallthru
      _
    // Predicated region
    $region10: #{tpu_custom_call.1} parent=1 // pred_check
      _
    $region11: #{tpu_custom_call.1} parent=1 // pred_check_branch
      %36 = sbr.rel (0) target = $region13
    $region12: #{tpu_custom_call.1} parent=1 // pred_region
      %s38 = ssub.s32 96, 96
      %39 = vsyncadd [#allocation6], %s38
      %s41 = sshll.u32 [#allocation7], 4
      %s42 = int_to_ptr.vmem [resolvable:$true] %s41
      %44 = dma.hbm_to_vmem [thread:$0]  %s2, 96, %s42, [#allocation6]
    $region13: #{tpu_custom_call.1} parent=1 // pred_fallthru
      _
    // Predicated region
    $region14: #{tpu_custom_call.1} parent=1 // pred_check
      _
    $region15: #{tpu_custom_call.1} parent=1 // pred_check_branch
      %46 = sbr.rel (0) target = $region17
    $region16: #{tpu_custom_call.1} parent=1 // pred_region
      %47 = dma.done [#allocation3], 2048
    $region17: #{tpu_custom_call.1} parent=1 // pred_fallthru
      _
    // Predicated region
    $region18: #{tpu_custom_call.1} parent=1 // pred_check
      _
    $region19: #{tpu_custom_call.1} parent=1 // pred_check_branch
      %49 = sbr.rel (0) target = $region21
    $region20: #{tpu_custom_call.1} parent=1 // pred_region
      %50 = dma.done [#allocation6], 49152
    $region21: #{tpu_custom_call.1} parent=1 // pred_fallthru
      _
    // Predicated region
    $region22: #{tpu_custom_call.1} parent=1 // pred_check
      _
    $region23: #{tpu_custom_call.1} parent=1 // pred_check_branch
      %52 = sbr.rel (0) target = $region25
    $region24: #{tpu_custom_call.1} parent=1 // pred_region
      %53 = dma.done [#allocation6], 96
    $region25: #{tpu_custom_call.1} parent=1 // pred_fallthru
      _
    %v54 = vld [vmem:[#allocation2] sm:$0xff]
    %v55 = vld [vmem:[#allocation2 + $0x8] sm:$0xff]
    %v56 = vld [vmem:[#allocation2 + $0x10] sm:$0xff]
    %v57 = vld [vmem:[#allocation2 + $0x18] sm:$0xff]
    %v58 = vld [vmem:[#allocation2 + $0x20] sm:$0xff]
    %v59 = vld [vmem:[#allocation2 + $0x28] sm:$0xff]
    %v60 = vld [vmem:[#allocation2 + $0x30] sm:$0xff]
    %v61 = vld [vmem:[#allocation2 + $0x38] sm:$0xff]
    %v62 = vld [vmem:[#allocation2 + $0x40] sm:$0xff]
    %v63 = vld [vmem:[#allocation2 + $0x48] sm:$0xff]
    %v64 = vld [vmem:[#allocation2 + $0x50] sm:$0xff]
    %v65 = vld [vmem:[#allocation2 + $0x58] sm:$0xff]
    %v66 = vld [vmem:[#allocation2 + $0x60] sm:$0xff]
    %v67 = vld [vmem:[#allocation2 + $0x68] sm:$0xff]
    %v68 = vld [vmem:[#allocation2 + $0x70] sm:$0xff]
    %v69 = vld [vmem:[#allocation2 + $0x78] sm:$0xff]
    %v70 = vpack.c.bf16 %v62, %v54
    %v71 = vpack.c.bf16 %v63, %v55
    %v72 = vpack.c.bf16 %v64, %v56
    %v73 = vpack.c.bf16 %v65, %v57
    %v74 = vpack.c.bf16 %v66, %v58
    %v75 = vpack.c.bf16 %v67, %v59
    %v76 = vpack.c.bf16 %v68, %v60
    %v77 = vpack.c.bf16 %v69, %v61
    %v78 = vld [vmem:[#allocation5] sm:$0xff]
    %v79 = vld [vmem:[#allocation5 + $0x8] sm:$0xff]
    %v80 = vld [vmem:[#allocation5 + $0x10] sm:$0xff]
    %v81 = vld [vmem:[#allocation5 + $0x18] sm:$0xff]
    %v82 = vld [vmem:[#allocation5 + $0x20] sm:$0xff]
    %v83 = vld [vmem:[#allocation5 + $0x28] sm:$0xff]
    %v84 = vld [vmem:[#allocation5 + $0x30] sm:$0xff]
    %v85 = vld [vmem:[#allocation5 + $0x38] sm:$0xff]
    %v86 = vld [vmem:[#allocation5 + $0x40] sm:$0xff]
    %v87 = vld [vmem:[#allocation5 + $0x48] sm:$0xff]
    %v88 = vld [vmem:[#allocation5 + $0x50] sm:$0xff]
    %v89 = vld [vmem:[#allocation5 + $0x58] sm:$0xff]
    %v90 = vld [vmem:[#allocation5 + $0x60] sm:$0xff]
    %v91 = vld [vmem:[#allocation5 + $0x68] sm:$0xff]
    %v92 = vld [vmem:[#allocation5 + $0x70] sm:$0xff]
    %v93 = vld [vmem:[#allocation5 + $0x78] sm:$0xff]
    %v94 = vld [vmem:[#allocation5 + $0x80] sm:$0xff]
    %v95 = vld [vmem:[#allocation5 + $0x88] sm:$0xff]
    %v96 = vld [vmem:[#allocation5 + $0x90] sm:$0xff]
    %v97 = vld [vmem:[#allocation5 + $0x98] sm:$0xff]
    %v98 = vld [vmem:[#allocation5 + $0xa0] sm:$0xff]
    %v99 = vld [vmem:[#allocation5 + $0xa8] sm:$0xff]
    %v100 = vld [vmem:[#allocation5 + $0xb0] sm:$0xff]
    %v101 = vld [vmem:[#allocation5 + $0xb8] sm:$0xff]
    %v102 = vld [vmem:[#allocation5 + $0xc0] sm:$0xff]
    %v103 = vld [vmem:[#allocation5 + $0xc8] sm:$0xff]
    %v104 = vld [vmem:[#allocation5 + $0xd0] sm:$0xff]
    %v105 = vld [vmem:[#allocation5 + $0xd8] sm:$0xff]
    %v106 = vld [vmem:[#allocation5 + $0xe0] sm:$0xff]
    %v107 = vld [vmem:[#allocation5 + $0xe8] sm:$0xff]
    %v108 = vld [vmem:[#allocation5 + $0xf0] sm:$0xff]
    %v109 = vld [vmem:[#allocation5 + $0xf8] sm:$0xff]
    %v110 = vld [vmem:[#allocation5 + $0x100] sm:$0xff]
    %v111 = vld [vmem:[#allocation5 + $0x108] sm:$0xff]
    %v112 = vld [vmem:[#allocation5 + $0x110] sm:$0xff]
    %v113 = vld [vmem:[#allocation5 + $0x118] sm:$0xff]
    %v114 = vld [vmem:[#allocation5 + $0x120] sm:$0xff]
    %v115 = vld [vmem:[#allocation5 + $0x128] sm:$0xff]
    %v116 = vld [vmem:[#allocation5 + $0x130] sm:$0xff]
    %v117 = vld [vmem:[#allocation5 + $0x138] sm:$0xff]
    %v118 = vld [vmem:[#allocation5 + $0x140] sm:$0xff]
    %v119 = vld [vmem:[#allocation5 + $0x148] sm:$0xff]
    %v120 = vld [vmem:[#allocation5 + $0x150] sm:$0xff]
    %v121 = vld [vmem:[#allocation5 + $0x158] sm:$0xff]
    %v122 = vld [vmem:[#allocation5 + $0x160] sm:$0xff]
    %v123 = vld [vmem:[#allocation5 + $0x168] sm:$0xff]
    %v124 = vld [vmem:[#allocation5 + $0x170] sm:$0xff]
    %v125 = vld [vmem:[#allocation5 + $0x178] sm:$0xff]
    %v126 = vld [vmem:[#allocation5 + $0x180] sm:$0xff]
    %v127 = vld [vmem:[#allocation5 + $0x188] sm:$0xff]
    %v128 = vld [vmem:[#allocation5 + $0x190] sm:$0xff]
    %v129 = vld [vmem:[#allocation5 + $0x198] sm:$0xff]
    %v130 = vld [vmem:[#allocation5 + $0x1a0] sm:$0xff]
    %v131 = vld [vmem:[#allocation5 + $0x1a8] sm:$0xff]
    %v132 = vld [vmem:[#allocation5 + $0x1b0] sm:$0xff]
    %v133 = vld [vmem:[#allocation5 + $0x1b8] sm:$0xff]
    %v134 = vld [vmem:[#allocation5 + $0x1c0] sm:$0xff]
    %v135 = vld [vmem:[#allocation5 + $0x1c8] sm:$0xff]
    %v136 = vld [vmem:[#allocation5 + $0x1d0] sm:$0xff]
    %v137 = vld [vmem:[#allocation5 + $0x1d8] sm:$0xff]
    %v138 = vld [vmem:[#allocation5 + $0x1e0] sm:$0xff]
    %v139 = vld [vmem:[#allocation5 + $0x1e8] sm:$0xff]
    %v140 = vld [vmem:[#allocation5 + $0x1f0] sm:$0xff]
    %v141 = vld [vmem:[#allocation5 + $0x1f8] sm:$0xff]
    %v142 = vld [vmem:[#allocation5 + $0x200] sm:$0xff]
    %v143 = vld [vmem:[#allocation5 + $0x208] sm:$0xff]
    %v144 = vld [vmem:[#allocation5 + $0x210] sm:$0xff]
    %v145 = vld [vmem:[#allocation5 + $0x218] sm:$0xff]
    %v146 = vld [vmem:[#allocation5 + $0x220] sm:$0xff]
    %v147 = vld [vmem:[#allocation5 + $0x228] sm:$0xff]
    %v148 = vld [vmem:[#allocation5 + $0x230] sm:$0xff]
    %v149 = vld [vmem:[#allocation5 + $0x238] sm:$0xff]
    %v150 = vld [vmem:[#allocation5 + $0x240] sm:$0xff]
    %v151 = vld [vmem:[#allocation5 + $0x248] sm:$0xff]
    %v152 = vld [vmem:[#allocation5 + $0x250] sm:$0xff]
    %v153 = vld [vmem:[#allocation5 + $0x258] sm:$0xff]
    %v154 = vld [vmem:[#allocation5 + $0x260] sm:$0xff]
    %v155 = vld [vmem:[#allocation5 + $0x268] sm:$0xff]
    %v156 = vld [vmem:[#allocation5 + $0x270] sm:$0xff]
    %v157 = vld [vmem:[#allocation5 + $0x278] sm:$0xff]
    %v158 = vld [vmem:[#allocation5 + $0x280] sm:$0xff]
    %v159 = vld [vmem:[#allocation5 + $0x288] sm:$0xff]
    %v160 = vld [vmem:[#allocation5 + $0x290] sm:$0xff]
    %v161 = vld [vmem:[#allocation5 + $0x298] sm:$0xff]
    %v162 = vld [vmem:[#allocation5 + $0x2a0] sm:$0xff]
    %v163 = vld [vmem:[#allocation5 + $0x2a8] sm:$0xff]
    %v164 = vld [vmem:[#allocation5 + $0x2b0] sm:$0xff]
    %v165 = vld [vmem:[#allocation5 + $0x2b8] sm:$0xff]
    %v166 = vld [vmem:[#allocation5 + $0x2c0] sm:$0xff]
    %v167 = vld [vmem:[#allocation5 + $0x2c8] sm:$0xff]
    %v168 = vld [vmem:[#allocation5 + $0x2d0] sm:$0xff]
    %v169 = vld [vmem:[#allocation5 + $0x2d8] sm:$0xff]
    %v170 = vld [vmem:[#allocation5 + $0x2e0] sm:$0xff]
    %v171 = vld [vmem:[#allocation5 + $0x2e8] sm:$0xff]
    %v172 = vld [vmem:[#allocation5 + $0x2f0] sm:$0xff]
    %v173 = vld [vmem:[#allocation5 + $0x2f8] sm:$0xff]
    %v174 = vld [vmem:[#allocation5 + $0x300] sm:$0xff]
    %v175 = vld [vmem:[#allocation5 + $0x308] sm:$0xff]
    %v176 = vld [vmem:[#allocation5 + $0x310] sm:$0xff]
    %v177 = vld [vmem:[#allocation5 + $0x318] sm:$0xff]
    %v178 = vld [vmem:[#allocation5 + $0x320] sm:$0xff]
    %v179 = vld [vmem:[#allocation5 + $0x328] sm:$0xff]
    %v180 = vld [vmem:[#allocation5 + $0x330] sm:$0xff]
    %v181 = vld [vmem:[#allocation5 + $0x338] sm:$0xff]
    %v182 = vld [vmem:[#allocation5 + $0x340] sm:$0xff]
    %v183 = vld [vmem:[#allocation5 + $0x348] sm:$0xff]
    %v184 = vld [vmem:[#allocation5 + $0x350] sm:$0xff]
    %v185 = vld [vmem:[#allocation5 + $0x358] sm:$0xff]
    %v186 = vld [vmem:[#allocation5 + $0x360] sm:$0xff]
    %v187 = vld [vmem:[#allocation5 + $0x368] sm:$0xff]
    %v188 = vld [vmem:[#allocation5 + $0x370] sm:$0xff]
    %v189 = vld [vmem:[#allocation5 + $0x378] sm:$0xff]
    %v190 = vld [vmem:[#allocation5 + $0x380] sm:$0xff]
    %v191 = vld [vmem:[#allocation5 + $0x388] sm:$0xff]
    %v192 = vld [vmem:[#allocation5 + $0x390] sm:$0xff]
    %v193 = vld [vmem:[#allocation5 + $0x398] sm:$0xff]
    %v194 = vld [vmem:[#allocation5 + $0x3a0] sm:$0xff]
    %v195 = vld [vmem:[#allocation5 + $0x3a8] sm:$0xff]
    %v196 = vld [vmem:[#allocation5 + $0x3b0] sm:$0xff]
    %v197 = vld [vmem:[#allocation5 + $0x3b8] sm:$0xff]
    %v198 = vld [vmem:[#allocation5 + $0x3c0] sm:$0xff]
    %v199 = vld [vmem:[#allocation5 + $0x3c8] sm:$0xff]
    %v200 = vld [vmem:[#allocation5 + $0x3d0] sm:$0xff]
    %v201 = vld [vmem:[#allocation5 + $0x3d8] sm:$0xff]
    %v202 = vld [vmem:[#allocation5 + $0x3e0] sm:$0xff]
    %v203 = vld [vmem:[#allocation5 + $0x3e8] sm:$0xff]
    %v204 = vld [vmem:[#allocation5 + $0x3f0] sm:$0xff]
    %v205 = vld [vmem:[#allocation5 + $0x3f8] sm:$0xff]
    %v206 = vld [vmem:[#allocation5 + $0x400] sm:$0xff]
    %v207 = vld [vmem:[#allocation5 + $0x408] sm:$0xff]
    %v208 = vld [vmem:[#allocation5 + $0x410] sm:$0xff]
    %v209 = vld [vmem:[#allocation5 + $0x418] sm:$0xff]
    %v210 = vld [vmem:[#allocation5 + $0x420] sm:$0xff]
    %v211 = vld [vmem:[#allocation5 + $0x428] sm:$0xff]
    %v212 = vld [vmem:[#allocation5 + $0x430] sm:$0xff]
    %v213 = vld [vmem:[#allocation5 + $0x438] sm:$0xff]
    %v214 = vld [vmem:[#allocation5 + $0x440] sm:$0xff]
    %v215 = vld [vmem:[#allocation5 + $0x448] sm:$0xff]
    %v216 = vld [vmem:[#allocation5 + $0x450] sm:$0xff]
    %v217 = vld [vmem:[#allocation5 + $0x458] sm:$0xff]
    %v218 = vld [vmem:[#allocation5 + $0x460] sm:$0xff]
    %v219 = vld [vmem:[#allocation5 + $0x468] sm:$0xff]
    %v220 = vld [vmem:[#allocation5 + $0x470] sm:$0xff]
    %v221 = vld [vmem:[#allocation5 + $0x478] sm:$0xff]
    %v222 = vld [vmem:[#allocation5 + $0x480] sm:$0xff]
    %v223 = vld [vmem:[#allocation5 + $0x488] sm:$0xff]
    %v224 = vld [vmem:[#allocation5 + $0x490] sm:$0xff]
    %v225 = vld [vmem:[#allocation5 + $0x498] sm:$0xff]
    %v226 = vld [vmem:[#allocation5 + $0x4a0] sm:$0xff]
    %v227 = vld [vmem:[#allocation5 + $0x4a8] sm:$0xff]
    %v228 = vld [vmem:[#allocation5 + $0x4b0] sm:$0xff]
    %v229 = vld [vmem:[#allocation5 + $0x4b8] sm:$0xff]
    %v230 = vld [vmem:[#allocation5 + $0x4c0] sm:$0xff]
    %v231 = vld [vmem:[#allocation5 + $0x4c8] sm:$0xff]
    %v232 = vld [vmem:[#allocation5 + $0x4d0] sm:$0xff]
    %v233 = vld [vmem:[#allocation5 + $0x4d8] sm:$0xff]
    %v234 = vld [vmem:[#allocation5 + $0x4e0] sm:$0xff]
    %v235 = vld [vmem:[#allocation5 + $0x4e8] sm:$0xff]
    %v236 = vld [vmem:[#allocation5 + $0x4f0] sm:$0xff]
    %v237 = vld [vmem:[#allocation5 + $0x4f8] sm:$0xff]
    %v238 = vld [vmem:[#allocation5 + $0x500] sm:$0xff]
    %v239 = vld [vmem:[#allocation5 + $0x508] sm:$0xff]
    %v240 = vld [vmem:[#allocation5 + $0x510] sm:$0xff]
    %v241 = vld [vmem:[#allocation5 + $0x518] sm:$0xff]
    %v242 = vld [vmem:[#allocation5 + $0x520] sm:$0xff]
    %v243 = vld [vmem:[#allocation5 + $0x528] sm:$0xff]
    %v244 = vld [vmem:[#allocation5 + $0x530] sm:$0xff]
    %v245 = vld [vmem:[#allocation5 + $0x538] sm:$0xff]
    %v246 = vld [vmem:[#allocation5 + $0x540] sm:$0xff]
    %v247 = vld [vmem:[#allocation5 + $0x548] sm:$0xff]
    %v248 = vld [vmem:[#allocation5 + $0x550] sm:$0xff]
    %v249 = vld [vmem:[#allocation5 + $0x558] sm:$0xff]
    %v250 = vld [vmem:[#allocation5 + $0x560] sm:$0xff]
    %v251 = vld [vmem:[#allocation5 + $0x568] sm:$0xff]
    %v252 = vld [vmem:[#allocation5 + $0x570] sm:$0xff]
    %v253 = vld [vmem:[#allocation5 + $0x578] sm:$0xff]
    %v254 = vld [vmem:[#allocation5 + $0x580] sm:$0xff]
    %v255 = vld [vmem:[#allocation5 + $0x588] sm:$0xff]
    %v256 = vld [vmem:[#allocation5 + $0x590] sm:$0xff]
    %v257 = vld [vmem:[#allocation5 + $0x598] sm:$0xff]
    %v258 = vld [vmem:[#allocation5 + $0x5a0] sm:$0xff]
    %v259 = vld [vmem:[#allocation5 + $0x5a8] sm:$0xff]
    %v260 = vld [vmem:[#allocation5 + $0x5b0] sm:$0xff]
    %v261 = vld [vmem:[#allocation5 + $0x5b8] sm:$0xff]
    %v262 = vld [vmem:[#allocation5 + $0x5c0] sm:$0xff]
    %v263 = vld [vmem:[#allocation5 + $0x5c8] sm:$0xff]
    %v264 = vld [vmem:[#allocation5 + $0x5d0] sm:$0xff]
    %v265 = vld [vmem:[#allocation5 + $0x5d8] sm:$0xff]
    %v266 = vld [vmem:[#allocation5 + $0x5e0] sm:$0xff]
    %v267 = vld [vmem:[#allocation5 + $0x5e8] sm:$0xff]
    %v268 = vld [vmem:[#allocation5 + $0x5f0] sm:$0xff]
    %v269 = vld [vmem:[#allocation5 + $0x5f8] sm:$0xff]
    %v270 = vld [vmem:[#allocation5 + $0x600] sm:$0xff]
    %v271 = vld [vmem:[#allocation5 + $0x608] sm:$0xff]
    %v272 = vld [vmem:[#allocation5 + $0x610] sm:$0xff]
    %v273 = vld [vmem:[#allocation5 + $0x618] sm:$0xff]
    %v274 = vld [vmem:[#allocation5 + $0x620] sm:$0xff]
    %v275 = vld [vmem:[#allocation5 + $0x628] sm:$0xff]
    %v276 = vld [vmem:[#allocation5 + $0x630] sm:$0xff]
    %v277 = vld [vmem:[#allocation5 + $0x638] sm:$0xff]
    %v278 = vld [vmem:[#allocation5 + $0x640] sm:$0xff]
    %v279 = vld [vmem:[#allocation5 + $0x648] sm:$0xff]
    %v280 = vld [vmem:[#allocation5 + $0x650] sm:$0xff]
    %v281 = vld [vmem:[#allocation5 + $0x658] sm:$0xff]
    %v282 = vld [vmem:[#allocation5 + $0x660] sm:$0xff]
    %v283 = vld [vmem:[#allocation5 + $0x668] sm:$0xff]
    %v284 = vld [vmem:[#allocation5 + $0x670] sm:$0xff]
    %v285 = vld [vmem:[#allocation5 + $0x678] sm:$0xff]
    %v286 = vld [vmem:[#allocation5 + $0x680] sm:$0xff]
    %v287 = vld [vmem:[#allocation5 + $0x688] sm:$0xff]
    %v288 = vld [vmem:[#allocation5 + $0x690] sm:$0xff]
    %v289 = vld [vmem:[#allocation5 + $0x698] sm:$0xff]
    %v290 = vld [vmem:[#allocation5 + $0x6a0] sm:$0xff]
    %v291 = vld [vmem:[#allocation5 + $0x6a8] sm:$0xff]
    %v292 = vld [vmem:[#allocation5 + $0x6b0] sm:$0xff]
    %v293 = vld [vmem:[#allocation5 + $0x6b8] sm:$0xff]
    %v294 = vld [vmem:[#allocation5 + $0x6c0] sm:$0xff]
    %v295 = vld [vmem:[#allocation5 + $0x6c8] sm:$0xff]
    %v296 = vld [vmem:[#allocation5 + $0x6d0] sm:$0xff]
    %v297 = vld [vmem:[#allocation5 + $0x6d8] sm:$0xff]
    %v298 = vld [vmem:[#allocation5 + $0x6e0] sm:$0xff]
    %v299 = vld [vmem:[#allocation5 + $0x6e8] sm:$0xff]
    %v300 = vld [vmem:[#allocation5 + $0x6f0] sm:$0xff]
    %v301 = vld [vmem:[#allocation5 + $0x6f8] sm:$0xff]
    %v302 = vld [vmem:[#allocation5 + $0x700] sm:$0xff]
    %v303 = vld [vmem:[#allocation5 + $0x708] sm:$0xff]
    %v304 = vld [vmem:[#allocation5 + $0x710] sm:$0xff]
    %v305 = vld [vmem:[#allocation5 + $0x718] sm:$0xff]
    %v306 = vld [vmem:[#allocation5 + $0x720] sm:$0xff]
    %v307 = vld [vmem:[#allocation5 + $0x728] sm:$0xff]
    %v308 = vld [vmem:[#allocation5 + $0x730] sm:$0xff]
    %v309 = vld [vmem:[#allocation5 + $0x738] sm:$0xff]
    %v310 = vld [vmem:[#allocation5 + $0x740] sm:$0xff]
    %v311 = vld [vmem:[#allocation5 + $0x748] sm:$0xff]
    %v312 = vld [vmem:[#allocation5 + $0x750] sm:$0xff]
    %v313 = vld [vmem:[#allocation5 + $0x758] sm:$0xff]
    %v314 = vld [vmem:[#allocation5 + $0x760] sm:$0xff]
    %v315 = vld [vmem:[#allocation5 + $0x768] sm:$0xff]
    %v316 = vld [vmem:[#allocation5 + $0x770] sm:$0xff]
    %v317 = vld [vmem:[#allocation5 + $0x778] sm:$0xff]
    %v318 = vld [vmem:[#allocation5 + $0x780] sm:$0xff]
    %v319 = vld [vmem:[#allocation5 + $0x788] sm:$0xff]
    %v320 = vld [vmem:[#allocation5 + $0x790] sm:$0xff]
    %v321 = vld [vmem:[#allocation5 + $0x798] sm:$0xff]
    %v322 = vld [vmem:[#allocation5 + $0x7a0] sm:$0xff]
    %v323 = vld [vmem:[#allocation5 + $0x7a8] sm:$0xff]
    %v324 = vld [vmem:[#allocation5 + $0x7b0] sm:$0xff]
    %v325 = vld [vmem:[#allocation5 + $0x7b8] sm:$0xff]
    %v326 = vld [vmem:[#allocation5 + $0x7c0] sm:$0xff]
    %v327 = vld [vmem:[#allocation5 + $0x7c8] sm:$0xff]
    %v328 = vld [vmem:[#allocation5 + $0x7d0] sm:$0xff]
    %v329 = vld [vmem:[#allocation5 + $0x7d8] sm:$0xff]
    %v330 = vld [vmem:[#allocation5 + $0x7e0] sm:$0xff]
    %v331 = vld [vmem:[#allocation5 + $0x7e8] sm:$0xff]
    %v332 = vld [vmem:[#allocation5 + $0x7f0] sm:$0xff]
    %v333 = vld [vmem:[#allocation5 + $0x7f8] sm:$0xff]
    %v334 = vld [vmem:[#allocation5 + $0x800] sm:$0xff]
    %v335 = vld [vmem:[#allocation5 + $0x808] sm:$0xff]
    %v336 = vld [vmem:[#allocation5 + $0x810] sm:$0xff]
    %v337 = vld [vmem:[#allocation5 + $0x818] sm:$0xff]
    %v338 = vld [vmem:[#allocation5 + $0x820] sm:$0xff]
    %v339 = vld [vmem:[#allocation5 + $0x828] sm:$0xff]
    %v340 = vld [vmem:[#allocation5 + $0x830] sm:$0xff]
    %v341 = vld [vmem:[#allocation5 + $0x838] sm:$0xff]
    %v342 = vld [vmem:[#allocation5 + $0x840] sm:$0xff]
    %v343 = vld [vmem:[#allocation5 + $0x848] sm:$0xff]
    %v344 = vld [vmem:[#allocation5 + $0x850] sm:$0xff]
    %v345 = vld [vmem:[#allocation5 + $0x858] sm:$0xff]
    %v346 = vld [vmem:[#allocation5 + $0x860] sm:$0xff]
    %v347 = vld [vmem:[#allocation5 + $0x868] sm:$0xff]
    %v348 = vld [vmem:[#allocation5 + $0x870] sm:$0xff]
    %v349 = vld [vmem:[#allocation5 + $0x878] sm:$0xff]
    %v350 = vld [vmem:[#allocation5 + $0x880] sm:$0xff]
    %v351 = vld [vmem:[#allocation5 + $0x888] sm:$0xff]
    %v352 = vld [vmem:[#allocation5 + $0x890] sm:$0xff]
    %v353 = vld [vmem:[#allocation5 + $0x898] sm:$0xff]
    %v354 = vld [vmem:[#allocation5 + $0x8a0] sm:$0xff]
    %v355 = vld [vmem:[#allocation5 + $0x8a8] sm:$0xff]
    %v356 = vld [vmem:[#allocation5 + $0x8b0] sm:$0xff]
    %v357 = vld [vmem:[#allocation5 + $0x8b8] sm:$0xff]
    %v358 = vld [vmem:[#allocation5 + $0x8c0] sm:$0xff]
    %v359 = vld [vmem:[#allocation5 + $0x8c8] sm:$0xff]
    %v360 = vld [vmem:[#allocation5 + $0x8d0] sm:$0xff]
    %v361 = vld [vmem:[#allocation5 + $0x8d8] sm:$0xff]
    %v362 = vld [vmem:[#allocation5 + $0x8e0] sm:$0xff]
    %v363 = vld [vmem:[#allocation5 + $0x8e8] sm:$0xff]
    %v364 = vld [vmem:[#allocation5 + $0x8f0] sm:$0xff]
    %v365 = vld [vmem:[#allocation5 + $0x8f8] sm:$0xff]
    %v366 = vld [vmem:[#allocation5 + $0x900] sm:$0xff]
    %v367 = vld [vmem:[#allocation5 + $0x908] sm:$0xff]
    %v368 = vld [vmem:[#allocation5 + $0x910] sm:$0xff]
    %v369 = vld [vmem:[#allocation5 + $0x918] sm:$0xff]
    %v370 = vld [vmem:[#allocation5 + $0x920] sm:$0xff]
    %v371 = vld [vmem:[#allocation5 + $0x928] sm:$0xff]
    %v372 = vld [vmem:[#allocation5 + $0x930] sm:$0xff]
    %v373 = vld [vmem:[#allocation5 + $0x938] sm:$0xff]
    %v374 = vld [vmem:[#allocation5 + $0x940] sm:$0xff]
    %v375 = vld [vmem:[#allocation5 + $0x948] sm:$0xff]
    %v376 = vld [vmem:[#allocation5 + $0x950] sm:$0xff]
    %v377 = vld [vmem:[#allocation5 + $0x958] sm:$0xff]
    %v378 = vld [vmem:[#allocation5 + $0x960] sm:$0xff]
    %v379 = vld [vmem:[#allocation5 + $0x968] sm:$0xff]
    %v380 = vld [vmem:[#allocation5 + $0x970] sm:$0xff]
    %v381 = vld [vmem:[#allocation5 + $0x978] sm:$0xff]
    %v382 = vld [vmem:[#allocation5 + $0x980] sm:$0xff]
    %v383 = vld [vmem:[#allocation5 + $0x988] sm:$0xff]
    %v384 = vld [vmem:[#allocation5 + $0x990] sm:$0xff]
    %v385 = vld [vmem:[#allocation5 + $0x998] sm:$0xff]
    %v386 = vld [vmem:[#allocation5 + $0x9a0] sm:$0xff]
    %v387 = vld [vmem:[#allocation5 + $0x9a8] sm:$0xff]
    %v388 = vld [vmem:[#allocation5 + $0x9b0] sm:$0xff]
    %v389 = vld [vmem:[#allocation5 + $0x9b8] sm:$0xff]
    %v390 = vld [vmem:[#allocation5 + $0x9c0] sm:$0xff]
    %v391 = vld [vmem:[#allocation5 + $0x9c8] sm:$0xff]
    %v392 = vld [vmem:[#allocation5 + $0x9d0] sm:$0xff]
    %v393 = vld [vmem:[#allocation5 + $0x9d8] sm:$0xff]
    %v394 = vld [vmem:[#allocation5 + $0x9e0] sm:$0xff]
    %v395 = vld [vmem:[#allocation5 + $0x9e8] sm:$0xff]
    %v396 = vld [vmem:[#allocation5 + $0x9f0] sm:$0xff]
    %v397 = vld [vmem:[#allocation5 + $0x9f8] sm:$0xff]
    %v398 = vld [vmem:[#allocation5 + $0xa00] sm:$0xff]
    %v399 = vld [vmem:[#allocation5 + $0xa08] sm:$0xff]
    %v400 = vld [vmem:[#allocation5 + $0xa10] sm:$0xff]
    %v401 = vld [vmem:[#allocation5 + $0xa18] sm:$0xff]
    %v402 = vld [vmem:[#allocation5 + $0xa20] sm:$0xff]
    %v403 = vld [vmem:[#allocation5 + $0xa28] sm:$0xff]
    %v404 = vld [vmem:[#allocation5 + $0xa30] sm:$0xff]
    %v405 = vld [vmem:[#allocation5 + $0xa38] sm:$0xff]
    %v406 = vld [vmem:[#allocation5 + $0xa40] sm:$0xff]
    %v407 = vld [vmem:[#allocation5 + $0xa48] sm:$0xff]
    %v408 = vld [vmem:[#allocation5 + $0xa50] sm:$0xff]
    %v409 = vld [vmem:[#allocation5 + $0xa58] sm:$0xff]
    %v410 = vld [vmem:[#allocation5 + $0xa60] sm:$0xff]
    %v411 = vld [vmem:[#allocation5 + $0xa68] sm:$0xff]
    %v412 = vld [vmem:[#allocation5 + $0xa70] sm:$0xff]
    %v413 = vld [vmem:[#allocation5 + $0xa78] sm:$0xff]
    %v414 = vld [vmem:[#allocation5 + $0xa80] sm:$0xff]
    %v415 = vld [vmem:[#allocation5 + $0xa88] sm:$0xff]
    %v416 = vld [vmem:[#allocation5 + $0xa90] sm:$0xff]
    %v417 = vld [vmem:[#allocation5 + $0xa98] sm:$0xff]
    %v418 = vld [vmem:[#allocation5 + $0xaa0] sm:$0xff]
    %v419 = vld [vmem:[#allocation5 + $0xaa8] sm:$0xff]
    %v420 = vld [vmem:[#allocation5 + $0xab0] sm:$0xff]
    %v421 = vld [vmem:[#allocation5 + $0xab8] sm:$0xff]
    %v422 = vld [vmem:[#allocation5 + $0xac0] sm:$0xff]
    %v423 = vld [vmem:[#allocation5 + $0xac8] sm:$0xff]
    %v424 = vld [vmem:[#allocation5 + $0xad0] sm:$0xff]
    %v425 = vld [vmem:[#allocation5 + $0xad8] sm:$0xff]
    %v426 = vld [vmem:[#allocation5 + $0xae0] sm:$0xff]
    %v427 = vld [vmem:[#allocation5 + $0xae8] sm:$0xff]
    %v428 = vld [vmem:[#allocation5 + $0xaf0] sm:$0xff]
    %v429 = vld [vmem:[#allocation5 + $0xaf8] sm:$0xff]
    %v430 = vld [vmem:[#allocation5 + $0xb00] sm:$0xff]
    %v431 = vld [vmem:[#allocation5 + $0xb08] sm:$0xff]
    %v432 = vld [vmem:[#allocation5 + $0xb10] sm:$0xff]
    %v433 = vld [vmem:[#allocation5 + $0xb18] sm:$0xff]
    %v434 = vld [vmem:[#allocation5 + $0xb20] sm:$0xff]
    %v435 = vld [vmem:[#allocation5 + $0xb28] sm:$0xff]
    %v436 = vld [vmem:[#allocation5 + $0xb30] sm:$0xff]
    %v437 = vld [vmem:[#allocation5 + $0xb38] sm:$0xff]
    %v438 = vld [vmem:[#allocation5 + $0xb40] sm:$0xff]
    %v439 = vld [vmem:[#allocation5 + $0xb48] sm:$0xff]
    %v440 = vld [vmem:[#allocation5 + $0xb50] sm:$0xff]
    %v441 = vld [vmem:[#allocation5 + $0xb58] sm:$0xff]
    %v442 = vld [vmem:[#allocation5 + $0xb60] sm:$0xff]
    %v443 = vld [vmem:[#allocation5 + $0xb68] sm:$0xff]
    %v444 = vld [vmem:[#allocation5 + $0xb70] sm:$0xff]
    %v445 = vld [vmem:[#allocation5 + $0xb78] sm:$0xff]
    %v446 = vld [vmem:[#allocation5 + $0xb80] sm:$0xff]
    %v447 = vld [vmem:[#allocation5 + $0xb88] sm:$0xff]
    %v448 = vld [vmem:[#allocation5 + $0xb90] sm:$0xff]
    %v449 = vld [vmem:[#allocation5 + $0xb98] sm:$0xff]
    %v450 = vld [vmem:[#allocation5 + $0xba0] sm:$0xff]
    %v451 = vld [vmem:[#allocation5 + $0xba8] sm:$0xff]
    %v452 = vld [vmem:[#allocation5 + $0xbb0] sm:$0xff]
    %v453 = vld [vmem:[#allocation5 + $0xbb8] sm:$0xff]
    %v454 = vld [vmem:[#allocation5 + $0xbc0] sm:$0xff]
    %v455 = vld [vmem:[#allocation5 + $0xbc8] sm:$0xff]
    %v456 = vld [vmem:[#allocation5 + $0xbd0] sm:$0xff]
    %v457 = vld [vmem:[#allocation5 + $0xbd8] sm:$0xff]
    %v458 = vld [vmem:[#allocation5 + $0xbe0] sm:$0xff]
    %v459 = vld [vmem:[#allocation5 + $0xbe8] sm:$0xff]
    %v460 = vld [vmem:[#allocation5 + $0xbf0] sm:$0xff]
    %v461 = vld [vmem:[#allocation5 + $0xbf8] sm:$0xff]
    %v462 = vld [vmem:[#allocation7] sm:$0x3f]
    %v464 = vlaneseq
    %v465 = vshrl.u32 %v464, 7
    %v466 = vsub.s32 0, %v465
    %v467 = vrot.slane %v462, %v466
    %v468 = vlaneseq
    %v469 = vshrl.u32 %v468, 7
    %v470 = vsub.s32 1, %v469
    %v471 = vrot.slane %v462, %v470
    %v472 = vlaneseq
    %v473 = vshrl.u32 %v472, 7
    %v474 = vsub.s32 2, %v473
    %v475 = vrot.slane %v462, %v474
    %v476 = vlaneseq
    %v477 = vshrl.u32 %v476, 7
    %v478 = vsub.s32 3, %v477
    %v479 = vrot.slane %v462, %v478
    %v480 = vlaneseq
    %v481 = vshrl.u32 %v480, 7
    %v482 = vsub.s32 4, %v481
    %v483 = vrot.slane %v462, %v482
    %v484 = vlaneseq
    %v485 = vshrl.u32 %v484, 7
    %v486 = vsub.s32 5, %v485
    %v487 = vrot.slane %v462, %v486
    %v878 = vunpack.c.l.b16 %v78
    %v879 = vunpack.c.h.b16 %v78
    %v880 = vunpack.c.l.b16 %v79
    %v881 = vunpack.c.h.b16 %v79
    %v882 = vunpack.c.l.b16 %v80
    %v883 = vunpack.c.h.b16 %v80
    %v884 = vunpack.c.l.b16 %v81
    %v885 = vunpack.c.h.b16 %v81
    %v886 = vunpack.c.l.b16 %v82
    %v887 = vunpack.c.h.b16 %v82
    %v888 = vunpack.c.l.b16 %v83
    %v889 = vunpack.c.h.b16 %v83
    %v890 = vunpack.c.l.b16 %v84
    %v891 = vunpack.c.h.b16 %v84
    %v892 = vunpack.c.l.b16 %v85
    %v893 = vunpack.c.h.b16 %v85
    %v894 = vunpack.c.l.b16 %v86
    %v895 = vunpack.c.h.b16 %v86
    %v896 = vunpack.c.l.b16 %v87
    %v897 = vunpack.c.h.b16 %v87
    %v898 = vunpack.c.l.b16 %v88
    %v899 = vunpack.c.h.b16 %v88
    %v900 = vunpack.c.l.b16 %v89
    %v901 = vunpack.c.h.b16 %v89
    %v902 = vunpack.c.l.b16 %v90
    %v903 = vunpack.c.h.b16 %v90
    %v904 = vunpack.c.l.b16 %v91
    %v905 = vunpack.c.h.b16 %v91
    %v906 = vunpack.c.l.b16 %v92
    %v907 = vunpack.c.h.b16 %v92
    %v908 = vunpack.c.l.b16 %v93
    %v909 = vunpack.c.h.b16 %v93
    %v910 = vunpack.c.l.b16 %v94
    %v911 = vunpack.c.h.b16 %v94
    %v912 = vunpack.c.l.b16 %v95
    %v913 = vunpack.c.h.b16 %v95
    %v914 = vunpack.c.l.b16 %v96
    %v915 = vunpack.c.h.b16 %v96
    %v916 = vunpack.c.l.b16 %v97
    %v917 = vunpack.c.h.b16 %v97
    %v918 = vunpack.c.l.b16 %v98
    %v919 = vunpack.c.h.b16 %v98
    %v920 = vunpack.c.l.b16 %v99
    %v921 = vunpack.c.h.b16 %v99
    %v922 = vunpack.c.l.b16 %v100
    %v923 = vunpack.c.h.b16 %v100
    %v924 = vunpack.c.l.b16 %v101
    %v925 = vunpack.c.h.b16 %v101
    %v926 = vunpack.c.l.b16 %v102
    %v927 = vunpack.c.h.b16 %v102
    %v928 = vunpack.c.l.b16 %v103
    %v929 = vunpack.c.h.b16 %v103
    %v930 = vunpack.c.l.b16 %v104
    %v931 = vunpack.c.h.b16 %v104
    %v932 = vunpack.c.l.b16 %v105
    %v933 = vunpack.c.h.b16 %v105
    %v934 = vunpack.c.l.b16 %v106
    %v935 = vunpack.c.h.b16 %v106
    %v936 = vunpack.c.l.b16 %v107
    %v937 = vunpack.c.h.b16 %v107
    %v938 = vunpack.c.l.b16 %v108
    %v939 = vunpack.c.h.b16 %v108
    %v940 = vunpack.c.l.b16 %v109
    %v941 = vunpack.c.h.b16 %v109
    %v942 = vunpack.c.l.b16 %v110
    %v943 = vunpack.c.h.b16 %v110
    %v944 = vunpack.c.l.b16 %v111
    %v945 = vunpack.c.h.b16 %v111
    %v946 = vunpack.c.l.b16 %v112
    %v947 = vunpack.c.h.b16 %v112
    %v948 = vunpack.c.l.b16 %v113
    %v949 = vunpack.c.h.b16 %v113
    %v950 = vunpack.c.l.b16 %v114
    %v951 = vunpack.c.h.b16 %v114
    %v952 = vunpack.c.l.b16 %v115
    %v953 = vunpack.c.h.b16 %v115
    %v954 = vunpack.c.l.b16 %v116
    %v955 = vunpack.c.h.b16 %v116
    %v956 = vunpack.c.l.b16 %v117
    %v957 = vunpack.c.h.b16 %v117
    %v958 = vunpack.c.l.b16 %v118
    %v959 = vunpack.c.h.b16 %v118
    %v960 = vunpack.c.l.b16 %v119
    %v961 = vunpack.c.h.b16 %v119
    %v962 = vunpack.c.l.b16 %v120
    %v963 = vunpack.c.h.b16 %v120
    %v964 = vunpack.c.l.b16 %v121
    %v965 = vunpack.c.h.b16 %v121
    %v966 = vunpack.c.l.b16 %v122
    %v967 = vunpack.c.h.b16 %v122
    %v968 = vunpack.c.l.b16 %v123
    %v969 = vunpack.c.h.b16 %v123
    %v970 = vunpack.c.l.b16 %v124
    %v971 = vunpack.c.h.b16 %v124
    %v972 = vunpack.c.l.b16 %v125
    %v973 = vunpack.c.h.b16 %v125
    %v974 = vunpack.c.l.b16 %v126
    %v975 = vunpack.c.h.b16 %v126
    %v976 = vunpack.c.l.b16 %v127
    %v977 = vunpack.c.h.b16 %v127
    %v978 = vunpack.c.l.b16 %v128
    %v979 = vunpack.c.h.b16 %v128
    %v980 = vunpack.c.l.b16 %v129
    %v981 = vunpack.c.h.b16 %v129
    %v982 = vunpack.c.l.b16 %v130
    %v983 = vunpack.c.h.b16 %v130
    %v984 = vunpack.c.l.b16 %v131
    %v985 = vunpack.c.h.b16 %v131
    %v986 = vunpack.c.l.b16 %v132
    %v987 = vunpack.c.h.b16 %v132
    %v988 = vunpack.c.l.b16 %v133
    %v989 = vunpack.c.h.b16 %v133
    %v990 = vunpack.c.l.b16 %v134
    %v991 = vunpack.c.h.b16 %v134
    %v992 = vunpack.c.l.b16 %v135
    %v993 = vunpack.c.h.b16 %v135
    %v994 = vunpack.c.l.b16 %v136
    %v995 = vunpack.c.h.b16 %v136
    %v996 = vunpack.c.l.b16 %v137
    %v997 = vunpack.c.h.b16 %v137
    %v998 = vunpack.c.l.b16 %v138
    %v999 = vunpack.c.h.b16 %v138
    %v1000 = vunpack.c.l.b16 %v139
    %v1001 = vunpack.c.h.b16 %v139
    %v1002 = vunpack.c.l.b16 %v140
    %v1003 = vunpack.c.h.b16 %v140
    %v1004 = vunpack.c.l.b16 %v141
    %v1005 = vunpack.c.h.b16 %v141
    %v1006 = vunpack.c.l.b16 %v142
    %v1007 = vunpack.c.h.b16 %v142
    %v1008 = vunpack.c.l.b16 %v143
    %v1009 = vunpack.c.h.b16 %v143
    %v1010 = vunpack.c.l.b16 %v144
    %v1011 = vunpack.c.h.b16 %v144
    %v1012 = vunpack.c.l.b16 %v145
    %v1013 = vunpack.c.h.b16 %v145
    %v1014 = vunpack.c.l.b16 %v146
    %v1015 = vunpack.c.h.b16 %v146
    %v1016 = vunpack.c.l.b16 %v147
    %v1017 = vunpack.c.h.b16 %v147
    %v1018 = vunpack.c.l.b16 %v148
    %v1019 = vunpack.c.h.b16 %v148
    %v1020 = vunpack.c.l.b16 %v149
    %v1021 = vunpack.c.h.b16 %v149
    %v1022 = vunpack.c.l.b16 %v150
    %v1023 = vunpack.c.h.b16 %v150
    %v1024 = vunpack.c.l.b16 %v151
    %v1025 = vunpack.c.h.b16 %v151
    %v1026 = vunpack.c.l.b16 %v152
    %v1027 = vunpack.c.h.b16 %v152
    %v1028 = vunpack.c.l.b16 %v153
    %v1029 = vunpack.c.h.b16 %v153
    %v1030 = vunpack.c.l.b16 %v154
    %v1031 = vunpack.c.h.b16 %v154
    %v1032 = vunpack.c.l.b16 %v155
    %v1033 = vunpack.c.h.b16 %v155
    %v1034 = vunpack.c.l.b16 %v156
    %v1035 = vunpack.c.h.b16 %v156
    %v1036 = vunpack.c.l.b16 %v157
    %v1037 = vunpack.c.h.b16 %v157
    %v1038 = vunpack.c.l.b16 %v158
    %v1039 = vunpack.c.h.b16 %v158
    %v1040 = vunpack.c.l.b16 %v159
    %v1041 = vunpack.c.h.b16 %v159
    %v1042 = vunpack.c.l.b16 %v160
    %v1043 = vunpack.c.h.b16 %v160
    %v1044 = vunpack.c.l.b16 %v161
    %v1045 = vunpack.c.h.b16 %v161
    %v1046 = vunpack.c.l.b16 %v162
    %v1047 = vunpack.c.h.b16 %v162
    %v1048 = vunpack.c.l.b16 %v163
    %v1049 = vunpack.c.h.b16 %v163
    %v1050 = vunpack.c.l.b16 %v164
    %v1051 = vunpack.c.h.b16 %v164
    %v1052 = vunpack.c.l.b16 %v165
    %v1053 = vunpack.c.h.b16 %v165
    %v1054 = vunpack.c.l.b16 %v166
    %v1055 = vunpack.c.h.b16 %v166
    %v1056 = vunpack.c.l.b16 %v167
    %v1057 = vunpack.c.h.b16 %v167
    %v1058 = vunpack.c.l.b16 %v168
    %v1059 = vunpack.c.h.b16 %v168
    %v1060 = vunpack.c.l.b16 %v169
    %v1061 = vunpack.c.h.b16 %v169
    %v1062 = vunpack.c.l.b16 %v170
    %v1063 = vunpack.c.h.b16 %v170
    %v1064 = vunpack.c.l.b16 %v171
    %v1065 = vunpack.c.h.b16 %v171
    %v1066 = vunpack.c.l.b16 %v172
    %v1067 = vunpack.c.h.b16 %v172
    %v1068 = vunpack.c.l.b16 %v173
    %v1069 = vunpack.c.h.b16 %v173
    %v1070 = vunpack.c.l.b16 %v174
    %v1071 = vunpack.c.h.b16 %v174
    %v1072 = vunpack.c.l.b16 %v175
    %v1073 = vunpack.c.h.b16 %v175
    %v1074 = vunpack.c.l.b16 %v176
    %v1075 = vunpack.c.h.b16 %v176
    %v1076 = vunpack.c.l.b16 %v177
    %v1077 = vunpack.c.h.b16 %v177
    %v1078 = vunpack.c.l.b16 %v178
    %v1079 = vunpack.c.h.b16 %v178
    %v1080 = vunpack.c.l.b16 %v179
    %v1081 = vunpack.c.h.b16 %v179
    %v1082 = vunpack.c.l.b16 %v180
    %v1083 = vunpack.c.h.b16 %v180
    %v1084 = vunpack.c.l.b16 %v181
    %v1085 = vunpack.c.h.b16 %v181
    %v1086 = vunpack.c.l.b16 %v182
    %v1087 = vunpack.c.h.b16 %v182
    %v1088 = vunpack.c.l.b16 %v183
    %v1089 = vunpack.c.h.b16 %v183
    %v1090 = vunpack.c.l.b16 %v184
    %v1091 = vunpack.c.h.b16 %v184
    %v1092 = vunpack.c.l.b16 %v185
    %v1093 = vunpack.c.h.b16 %v185
    %v1094 = vunpack.c.l.b16 %v186
    %v1095 = vunpack.c.h.b16 %v186
    %v1096 = vunpack.c.l.b16 %v187
    %v1097 = vunpack.c.h.b16 %v187
    %v1098 = vunpack.c.l.b16 %v188
    %v1099 = vunpack.c.h.b16 %v188
    %v1100 = vunpack.c.l.b16 %v189
    %v1101 = vunpack.c.h.b16 %v189
    %v1102 = vunpack.c.l.b16 %v190
    %v1103 = vunpack.c.h.b16 %v190
    %v1104 = vunpack.c.l.b16 %v191
    %v1105 = vunpack.c.h.b16 %v191
    %v1106 = vunpack.c.l.b16 %v192
    %v1107 = vunpack.c.h.b16 %v192
    %v1108 = vunpack.c.l.b16 %v193
    %v1109 = vunpack.c.h.b16 %v193
    %v1110 = vunpack.c.l.b16 %v194
    %v1111 = vunpack.c.h.b16 %v194
    %v1112 = vunpack.c.l.b16 %v195
    %v1113 = vunpack.c.h.b16 %v195
    %v1114 = vunpack.c.l.b16 %v196
    %v1115 = vunpack.c.h.b16 %v196
    %v1116 = vunpack.c.l.b16 %v197
    %v1117 = vunpack.c.h.b16 %v197
    %v1118 = vunpack.c.l.b16 %v198
    %v1119 = vunpack.c.h.b16 %v198
    %v1120 = vunpack.c.l.b16 %v199
    %v1121 = vunpack.c.h.b16 %v199
    %v1122 = vunpack.c.l.b16 %v200
    %v1123 = vunpack.c.h.b16 %v200
    %v1124 = vunpack.c.l.b16 %v201
    %v1125 = vunpack.c.h.b16 %v201
    %v1126 = vunpack.c.l.b16 %v202
    %v1127 = vunpack.c.h.b16 %v202
    %v1128 = vunpack.c.l.b16 %v203
    %v1129 = vunpack.c.h.b16 %v203
    %v1130 = vunpack.c.l.b16 %v204
    %v1131 = vunpack.c.h.b16 %v204
    %v1132 = vunpack.c.l.b16 %v205
    %v1133 = vunpack.c.h.b16 %v205
    %v1134 = vunpack.c.l.b16 %v206
    %v1135 = vunpack.c.h.b16 %v206
    %v1136 = vunpack.c.l.b16 %v207
    %v1137 = vunpack.c.h.b16 %v207
    %v1138 = vunpack.c.l.b16 %v208
    %v1139 = vunpack.c.h.b16 %v208
    %v1140 = vunpack.c.l.b16 %v209
    %v1141 = vunpack.c.h.b16 %v209
    %v1142 = vunpack.c.l.b16 %v210
    %v1143 = vunpack.c.h.b16 %v210
    %v1144 = vunpack.c.l.b16 %v211
    %v1145 = vunpack.c.h.b16 %v211
    %v1146 = vunpack.c.l.b16 %v212
    %v1147 = vunpack.c.h.b16 %v212
    %v1148 = vunpack.c.l.b16 %v213
    %v1149 = vunpack.c.h.b16 %v213
    %v1150 = vunpack.c.l.b16 %v214
    %v1151 = vunpack.c.h.b16 %v214
    %v1152 = vunpack.c.l.b16 %v215
    %v1153 = vunpack.c.h.b16 %v215
    %v1154 = vunpack.c.l.b16 %v216
    %v1155 = vunpack.c.h.b16 %v216
    %v1156 = vunpack.c.l.b16 %v217
    %v1157 = vunpack.c.h.b16 %v217
    %v1158 = vunpack.c.l.b16 %v218
    %v1159 = vunpack.c.h.b16 %v218
    %v1160 = vunpack.c.l.b16 %v219
    %v1161 = vunpack.c.h.b16 %v219
    %v1162 = vunpack.c.l.b16 %v220
    %v1163 = vunpack.c.h.b16 %v220
    %v1164 = vunpack.c.l.b16 %v221
    %v1165 = vunpack.c.h.b16 %v221
    %v1166 = vunpack.c.l.b16 %v222
    %v1167 = vunpack.c.h.b16 %v222
    %v1168 = vunpack.c.l.b16 %v223
    %v1169 = vunpack.c.h.b16 %v223
    %v1170 = vunpack.c.l.b16 %v224
    %v1171 = vunpack.c.h.b16 %v224
    %v1172 = vunpack.c.l.b16 %v225
    %v1173 = vunpack.c.h.b16 %v225
    %v1174 = vunpack.c.l.b16 %v226
    %v1175 = vunpack.c.h.b16 %v226
    %v1176 = vunpack.c.l.b16 %v227
    %v1177 = vunpack.c.h.b16 %v227
    %v1178 = vunpack.c.l.b16 %v228
    %v1179 = vunpack.c.h.b16 %v228
    %v1180 = vunpack.c.l.b16 %v229
    %v1181 = vunpack.c.h.b16 %v229
    %v1182 = vunpack.c.l.b16 %v230
    %v1183 = vunpack.c.h.b16 %v230
    %v1184 = vunpack.c.l.b16 %v231
    %v1185 = vunpack.c.h.b16 %v231
    %v1186 = vunpack.c.l.b16 %v232
    %v1187 = vunpack.c.h.b16 %v232
    %v1188 = vunpack.c.l.b16 %v233
    %v1189 = vunpack.c.h.b16 %v233
    %v1190 = vunpack.c.l.b16 %v234
    %v1191 = vunpack.c.h.b16 %v234
    %v1192 = vunpack.c.l.b16 %v235
    %v1193 = vunpack.c.h.b16 %v235
    %v1194 = vunpack.c.l.b16 %v236
    %v1195 = vunpack.c.h.b16 %v236
    %v1196 = vunpack.c.l.b16 %v237
    %v1197 = vunpack.c.h.b16 %v237
    %v1198 = vunpack.c.l.b16 %v238
    %v1199 = vunpack.c.h.b16 %v238
    %v1200 = vunpack.c.l.b16 %v239
    %v1201 = vunpack.c.h.b16 %v239
    %v1202 = vunpack.c.l.b16 %v240
    %v1203 = vunpack.c.h.b16 %v240
    %v1204 = vunpack.c.l.b16 %v241
    %v1205 = vunpack.c.h.b16 %v241
    %v1206 = vunpack.c.l.b16 %v242
    %v1207 = vunpack.c.h.b16 %v242
    %v1208 = vunpack.c.l.b16 %v243
    %v1209 = vunpack.c.h.b16 %v243
    %v1210 = vunpack.c.l.b16 %v244
    %v1211 = vunpack.c.h.b16 %v244
    %v1212 = vunpack.c.l.b16 %v245
    %v1213 = vunpack.c.h.b16 %v245
    %v1214 = vunpack.c.l.b16 %v246
    %v1215 = vunpack.c.h.b16 %v246
    %v1216 = vunpack.c.l.b16 %v247
    %v1217 = vunpack.c.h.b16 %v247
    %v1218 = vunpack.c.l.b16 %v248
    %v1219 = vunpack.c.h.b16 %v248
    %v1220 = vunpack.c.l.b16 %v249
    %v1221 = vunpack.c.h.b16 %v249
    %v1222 = vunpack.c.l.b16 %v250
    %v1223 = vunpack.c.h.b16 %v250
    %v1224 = vunpack.c.l.b16 %v251
    %v1225 = vunpack.c.h.b16 %v251
    %v1226 = vunpack.c.l.b16 %v252
    %v1227 = vunpack.c.h.b16 %v252
    %v1228 = vunpack.c.l.b16 %v253
    %v1229 = vunpack.c.h.b16 %v253
    %v1230 = vunpack.c.l.b16 %v254
    %v1231 = vunpack.c.h.b16 %v254
    %v1232 = vunpack.c.l.b16 %v255
    %v1233 = vunpack.c.h.b16 %v255
    %v1234 = vunpack.c.l.b16 %v256
    %v1235 = vunpack.c.h.b16 %v256
    %v1236 = vunpack.c.l.b16 %v257
    %v1237 = vunpack.c.h.b16 %v257
    %v1238 = vunpack.c.l.b16 %v258
    %v1239 = vunpack.c.h.b16 %v258
    %v1240 = vunpack.c.l.b16 %v259
    %v1241 = vunpack.c.h.b16 %v259
    %v1242 = vunpack.c.l.b16 %v260
    %v1243 = vunpack.c.h.b16 %v260
    %v1244 = vunpack.c.l.b16 %v261
    %v1245 = vunpack.c.h.b16 %v261
    %v1246 = vunpack.c.l.b16 %v262
    %v1247 = vunpack.c.h.b16 %v262
    %v1248 = vunpack.c.l.b16 %v263
    %v1249 = vunpack.c.h.b16 %v263
    %v1250 = vunpack.c.l.b16 %v264
    %v1251 = vunpack.c.h.b16 %v264
    %v1252 = vunpack.c.l.b16 %v265
    %v1253 = vunpack.c.h.b16 %v265
    %v1254 = vunpack.c.l.b16 %v266
    %v1255 = vunpack.c.h.b16 %v266
    %v1256 = vunpack.c.l.b16 %v267
    %v1257 = vunpack.c.h.b16 %v267
    %v1258 = vunpack.c.l.b16 %v268
    %v1259 = vunpack.c.h.b16 %v268
    %v1260 = vunpack.c.l.b16 %v269
    %v1261 = vunpack.c.h.b16 %v269
    %v1262 = vunpack.c.l.b16 %v270
    %v1263 = vunpack.c.h.b16 %v270
    %v1264 = vunpack.c.l.b16 %v271
    %v1265 = vunpack.c.h.b16 %v271
    %v1266 = vunpack.c.l.b16 %v272
    %v1267 = vunpack.c.h.b16 %v272
    %v1268 = vunpack.c.l.b16 %v273
    %v1269 = vunpack.c.h.b16 %v273
    %v1270 = vunpack.c.l.b16 %v274
    %v1271 = vunpack.c.h.b16 %v274
    %v1272 = vunpack.c.l.b16 %v275
    %v1273 = vunpack.c.h.b16 %v275
    %v1274 = vunpack.c.l.b16 %v276
    %v1275 = vunpack.c.h.b16 %v276
    %v1276 = vunpack.c.l.b16 %v277
    %v1277 = vunpack.c.h.b16 %v277
    %v1278 = vunpack.c.l.b16 %v278
    %v1279 = vunpack.c.h.b16 %v278
    %v1280 = vunpack.c.l.b16 %v279
    %v1281 = vunpack.c.h.b16 %v279
    %v1282 = vunpack.c.l.b16 %v280
    %v1283 = vunpack.c.h.b16 %v280
    %v1284 = vunpack.c.l.b16 %v281
    %v1285 = vunpack.c.h.b16 %v281
    %v1286 = vunpack.c.l.b16 %v282
    %v1287 = vunpack.c.h.b16 %v282
    %v1288 = vunpack.c.l.b16 %v283
    %v1289 = vunpack.c.h.b16 %v283
    %v1290 = vunpack.c.l.b16 %v284
    %v1291 = vunpack.c.h.b16 %v284
    %v1292 = vunpack.c.l.b16 %v285
    %v1293 = vunpack.c.h.b16 %v285
    %v1294 = vunpack.c.l.b16 %v286
    %v1295 = vunpack.c.h.b16 %v286
    %v1296 = vunpack.c.l.b16 %v287
    %v1297 = vunpack.c.h.b16 %v287
    %v1298 = vunpack.c.l.b16 %v288
    %v1299 = vunpack.c.h.b16 %v288
    %v1300 = vunpack.c.l.b16 %v289
    %v1301 = vunpack.c.h.b16 %v289
    %v1302 = vunpack.c.l.b16 %v290
    %v1303 = vunpack.c.h.b16 %v290
    %v1304 = vunpack.c.l.b16 %v291
    %v1305 = vunpack.c.h.b16 %v291
    %v1306 = vunpack.c.l.b16 %v292
    %v1307 = vunpack.c.h.b16 %v292
    %v1308 = vunpack.c.l.b16 %v293
    %v1309 = vunpack.c.h.b16 %v293
    %v1310 = vunpack.c.l.b16 %v294
    %v1311 = vunpack.c.h.b16 %v294
    %v1312 = vunpack.c.l.b16 %v295
    %v1313 = vunpack.c.h.b16 %v295
    %v1314 = vunpack.c.l.b16 %v296
    %v1315 = vunpack.c.h.b16 %v296
    %v1316 = vunpack.c.l.b16 %v297
    %v1317 = vunpack.c.h.b16 %v297
    %v1318 = vunpack.c.l.b16 %v298
    %v1319 = vunpack.c.h.b16 %v298
    %v1320 = vunpack.c.l.b16 %v299
    %v1321 = vunpack.c.h.b16 %v299
    %v1322 = vunpack.c.l.b16 %v300
    %v1323 = vunpack.c.h.b16 %v300
    %v1324 = vunpack.c.l.b16 %v301
    %v1325 = vunpack.c.h.b16 %v301
    %v1326 = vunpack.c.l.b16 %v302
    %v1327 = vunpack.c.h.b16 %v302
    %v1328 = vunpack.c.l.b16 %v303
    %v1329 = vunpack.c.h.b16 %v303
    %v1330 = vunpack.c.l.b16 %v304
    %v1331 = vunpack.c.h.b16 %v304
    %v1332 = vunpack.c.l.b16 %v305
    %v1333 = vunpack.c.h.b16 %v305
    %v1334 = vunpack.c.l.b16 %v306
    %v1335 = vunpack.c.h.b16 %v306
    %v1336 = vunpack.c.l.b16 %v307
    %v1337 = vunpack.c.h.b16 %v307
    %v1338 = vunpack.c.l.b16 %v308
    %v1339 = vunpack.c.h.b16 %v308
    %v1340 = vunpack.c.l.b16 %v309
    %v1341 = vunpack.c.h.b16 %v309
    %v1342 = vunpack.c.l.b16 %v310
    %v1343 = vunpack.c.h.b16 %v310
    %v1344 = vunpack.c.l.b16 %v311
    %v1345 = vunpack.c.h.b16 %v311
    %v1346 = vunpack.c.l.b16 %v312
    %v1347 = vunpack.c.h.b16 %v312
    %v1348 = vunpack.c.l.b16 %v313
    %v1349 = vunpack.c.h.b16 %v313
    %v1350 = vunpack.c.l.b16 %v314
    %v1351 = vunpack.c.h.b16 %v314
    %v1352 = vunpack.c.l.b16 %v315
    %v1353 = vunpack.c.h.b16 %v315
    %v1354 = vunpack.c.l.b16 %v316
    %v1355 = vunpack.c.h.b16 %v316
    %v1356 = vunpack.c.l.b16 %v317
    %v1357 = vunpack.c.h.b16 %v317
    %v1358 = vunpack.c.l.b16 %v318
    %v1359 = vunpack.c.h.b16 %v318
    %v1360 = vunpack.c.l.b16 %v319
    %v1361 = vunpack.c.h.b16 %v319
    %v1362 = vunpack.c.l.b16 %v320
    %v1363 = vunpack.c.h.b16 %v320
    %v1364 = vunpack.c.l.b16 %v321
    %v1365 = vunpack.c.h.b16 %v321
    %v1366 = vunpack.c.l.b16 %v322
    %v1367 = vunpack.c.h.b16 %v322
    %v1368 = vunpack.c.l.b16 %v323
    %v1369 = vunpack.c.h.b16 %v323
    %v1370 = vunpack.c.l.b16 %v324
    %v1371 = vunpack.c.h.b16 %v324
    %v1372 = vunpack.c.l.b16 %v325
    %v1373 = vunpack.c.h.b16 %v325
    %v1374 = vunpack.c.l.b16 %v326
    %v1375 = vunpack.c.h.b16 %v326
    %v1376 = vunpack.c.l.b16 %v327
    %v1377 = vunpack.c.h.b16 %v327
    %v1378 = vunpack.c.l.b16 %v328
    %v1379 = vunpack.c.h.b16 %v328
    %v1380 = vunpack.c.l.b16 %v329
    %v1381 = vunpack.c.h.b16 %v329
    %v1382 = vunpack.c.l.b16 %v330
    %v1383 = vunpack.c.h.b16 %v330
    %v1384 = vunpack.c.l.b16 %v331
    %v1385 = vunpack.c.h.b16 %v331
    %v1386 = vunpack.c.l.b16 %v332
    %v1387 = vunpack.c.h.b16 %v332
    %v1388 = vunpack.c.l.b16 %v333
    %v1389 = vunpack.c.h.b16 %v333
    %v1390 = vunpack.c.l.b16 %v334
    %v1391 = vunpack.c.h.b16 %v334
    %v1392 = vunpack.c.l.b16 %v335
    %v1393 = vunpack.c.h.b16 %v335
    %v1394 = vunpack.c.l.b16 %v336
    %v1395 = vunpack.c.h.b16 %v336
    %v1396 = vunpack.c.l.b16 %v337
    %v1397 = vunpack.c.h.b16 %v337
    %v1398 = vunpack.c.l.b16 %v338
    %v1399 = vunpack.c.h.b16 %v338
    %v1400 = vunpack.c.l.b16 %v339
    %v1401 = vunpack.c.h.b16 %v339
    %v1402 = vunpack.c.l.b16 %v340
    %v1403 = vunpack.c.h.b16 %v340
    %v1404 = vunpack.c.l.b16 %v341
    %v1405 = vunpack.c.h.b16 %v341
    %v1406 = vunpack.c.l.b16 %v342
    %v1407 = vunpack.c.h.b16 %v342
    %v1408 = vunpack.c.l.b16 %v343
    %v1409 = vunpack.c.h.b16 %v343
    %v1410 = vunpack.c.l.b16 %v344
    %v1411 = vunpack.c.h.b16 %v344
    %v1412 = vunpack.c.l.b16 %v345
    %v1413 = vunpack.c.h.b16 %v345
    %v1414 = vunpack.c.l.b16 %v346
    %v1415 = vunpack.c.h.b16 %v346
    %v1416 = vunpack.c.l.b16 %v347
    %v1417 = vunpack.c.h.b16 %v347
    %v1418 = vunpack.c.l.b16 %v348
    %v1419 = vunpack.c.h.b16 %v348
    %v1420 = vunpack.c.l.b16 %v349
    %v1421 = vunpack.c.h.b16 %v349
    %v1422 = vunpack.c.l.b16 %v350
    %v1423 = vunpack.c.h.b16 %v350
    %v1424 = vunpack.c.l.b16 %v351
    %v1425 = vunpack.c.h.b16 %v351
    %v1426 = vunpack.c.l.b16 %v352
    %v1427 = vunpack.c.h.b16 %v352
    %v1428 = vunpack.c.l.b16 %v353
    %v1429 = vunpack.c.h.b16 %v353
    %v1430 = vunpack.c.l.b16 %v354
    %v1431 = vunpack.c.h.b16 %v354
    %v1432 = vunpack.c.l.b16 %v355
    %v1433 = vunpack.c.h.b16 %v355
    %v1434 = vunpack.c.l.b16 %v356
    %v1435 = vunpack.c.h.b16 %v356
    %v1436 = vunpack.c.l.b16 %v357
    %v1437 = vunpack.c.h.b16 %v357
    %v1438 = vunpack.c.l.b16 %v358
    %v1439 = vunpack.c.h.b16 %v358
    %v1440 = vunpack.c.l.b16 %v359
    %v1441 = vunpack.c.h.b16 %v359
    %v1442 = vunpack.c.l.b16 %v360
    %v1443 = vunpack.c.h.b16 %v360
    %v1444 = vunpack.c.l.b16 %v361
    %v1445 = vunpack.c.h.b16 %v361
    %v1446 = vunpack.c.l.b16 %v362
    %v1447 = vunpack.c.h.b16 %v362
    %v1448 = vunpack.c.l.b16 %v363
    %v1449 = vunpack.c.h.b16 %v363
    %v1450 = vunpack.c.l.b16 %v364
    %v1451 = vunpack.c.h.b16 %v364
    %v1452 = vunpack.c.l.b16 %v365
    %v1453 = vunpack.c.h.b16 %v365
    %v1454 = vunpack.c.l.b16 %v366
    %v1455 = vunpack.c.h.b16 %v366
    %v1456 = vunpack.c.l.b16 %v367
    %v1457 = vunpack.c.h.b16 %v367
    %v1458 = vunpack.c.l.b16 %v368
    %v1459 = vunpack.c.h.b16 %v368
    %v1460 = vunpack.c.l.b16 %v369
    %v1461 = vunpack.c.h.b16 %v369
    %v1462 = vunpack.c.l.b16 %v370
    %v1463 = vunpack.c.h.b16 %v370
    %v1464 = vunpack.c.l.b16 %v371
    %v1465 = vunpack.c.h.b16 %v371
    %v1466 = vunpack.c.l.b16 %v372
    %v1467 = vunpack.c.h.b16 %v372
    %v1468 = vunpack.c.l.b16 %v373
    %v1469 = vunpack.c.h.b16 %v373
    %v1470 = vunpack.c.l.b16 %v374
    %v1471 = vunpack.c.h.b16 %v374
    %v1472 = vunpack.c.l.b16 %v375
    %v1473 = vunpack.c.h.b16 %v375
    %v1474 = vunpack.c.l.b16 %v376
    %v1475 = vunpack.c.h.b16 %v376
    %v1476 = vunpack.c.l.b16 %v377
    %v1477 = vunpack.c.h.b16 %v377
    %v1478 = vunpack.c.l.b16 %v378
    %v1479 = vunpack.c.h.b16 %v378
    %v1480 = vunpack.c.l.b16 %v379
    %v1481 = vunpack.c.h.b16 %v379
    %v1482 = vunpack.c.l.b16 %v380
    %v1483 = vunpack.c.h.b16 %v380
    %v1484 = vunpack.c.l.b16 %v381
    %v1485 = vunpack.c.h.b16 %v381
    %v1486 = vunpack.c.l.b16 %v382
    %v1487 = vunpack.c.h.b16 %v382
    %v1488 = vunpack.c.l.b16 %v383
    %v1489 = vunpack.c.h.b16 %v383
    %v1490 = vunpack.c.l.b16 %v384
    %v1491 = vunpack.c.h.b16 %v384
    %v1492 = vunpack.c.l.b16 %v385
    %v1493 = vunpack.c.h.b16 %v385
    %v1494 = vunpack.c.l.b16 %v386
    %v1495 = vunpack.c.h.b16 %v386
    %v1496 = vunpack.c.l.b16 %v387
    %v1497 = vunpack.c.h.b16 %v387
    %v1498 = vunpack.c.l.b16 %v388
    %v1499 = vunpack.c.h.b16 %v388
    %v1500 = vunpack.c.l.b16 %v389
    %v1501 = vunpack.c.h.b16 %v389
    %v1502 = vunpack.c.l.b16 %v390
    %v1503 = vunpack.c.h.b16 %v390
    %v1504 = vunpack.c.l.b16 %v391
    %v1505 = vunpack.c.h.b16 %v391
    %v1506 = vunpack.c.l.b16 %v392
    %v1507 = vunpack.c.h.b16 %v392
    %v1508 = vunpack.c.l.b16 %v393
    %v1509 = vunpack.c.h.b16 %v393
    %v1510 = vunpack.c.l.b16 %v394
    %v1511 = vunpack.c.h.b16 %v394
    %v1512 = vunpack.c.l.b16 %v395
    %v1513 = vunpack.c.h.b16 %v395
    %v1514 = vunpack.c.l.b16 %v396
    %v1515 = vunpack.c.h.b16 %v396
    %v1516 = vunpack.c.l.b16 %v397
    %v1517 = vunpack.c.h.b16 %v397
    %v1518 = vunpack.c.l.b16 %v398
    %v1519 = vunpack.c.h.b16 %v398
    %v1520 = vunpack.c.l.b16 %v399
    %v1521 = vunpack.c.h.b16 %v399
    %v1522 = vunpack.c.l.b16 %v400
    %v1523 = vunpack.c.h.b16 %v400
    %v1524 = vunpack.c.l.b16 %v401
    %v1525 = vunpack.c.h.b16 %v401
    %v1526 = vunpack.c.l.b16 %v402
    %v1527 = vunpack.c.h.b16 %v402
    %v1528 = vunpack.c.l.b16 %v403
    %v1529 = vunpack.c.h.b16 %v403
    %v1530 = vunpack.c.l.b16 %v404
    %v1531 = vunpack.c.h.b16 %v404
    %v1532 = vunpack.c.l.b16 %v405
    %v1533 = vunpack.c.h.b16 %v405
    %v1534 = vunpack.c.l.b16 %v406
    %v1535 = vunpack.c.h.b16 %v406
    %v1536 = vunpack.c.l.b16 %v407
    %v1537 = vunpack.c.h.b16 %v407
    %v1538 = vunpack.c.l.b16 %v408
    %v1539 = vunpack.c.h.b16 %v408
    %v1540 = vunpack.c.l.b16 %v409
    %v1541 = vunpack.c.h.b16 %v409
    %v1542 = vunpack.c.l.b16 %v410
    %v1543 = vunpack.c.h.b16 %v410
    %v1544 = vunpack.c.l.b16 %v411
    %v1545 = vunpack.c.h.b16 %v411
    %v1546 = vunpack.c.l.b16 %v412
    %v1547 = vunpack.c.h.b16 %v412
    %v1548 = vunpack.c.l.b16 %v413
    %v1549 = vunpack.c.h.b16 %v413
    %v1550 = vunpack.c.l.b16 %v414
    %v1551 = vunpack.c.h.b16 %v414
    %v1552 = vunpack.c.l.b16 %v415
    %v1553 = vunpack.c.h.b16 %v415
    %v1554 = vunpack.c.l.b16 %v416
    %v1555 = vunpack.c.h.b16 %v416
    %v1556 = vunpack.c.l.b16 %v417
    %v1557 = vunpack.c.h.b16 %v417
    %v1558 = vunpack.c.l.b16 %v418
    %v1559 = vunpack.c.h.b16 %v418
    %v1560 = vunpack.c.l.b16 %v419
    %v1561 = vunpack.c.h.b16 %v419
    %v1562 = vunpack.c.l.b16 %v420
    %v1563 = vunpack.c.h.b16 %v420
    %v1564 = vunpack.c.l.b16 %v421
    %v1565 = vunpack.c.h.b16 %v421
    %v1566 = vunpack.c.l.b16 %v422
    %v1567 = vunpack.c.h.b16 %v422
    %v1568 = vunpack.c.l.b16 %v423
    %v1569 = vunpack.c.h.b16 %v423
    %v1570 = vunpack.c.l.b16 %v424
    %v1571 = vunpack.c.h.b16 %v424
    %v1572 = vunpack.c.l.b16 %v425
    %v1573 = vunpack.c.h.b16 %v425
    %v1574 = vunpack.c.l.b16 %v426
    %v1575 = vunpack.c.h.b16 %v426
    %v1576 = vunpack.c.l.b16 %v427
    %v1577 = vunpack.c.h.b16 %v427
    %v1578 = vunpack.c.l.b16 %v428
    %v1579 = vunpack.c.h.b16 %v428
    %v1580 = vunpack.c.l.b16 %v429
    %v1581 = vunpack.c.h.b16 %v429
    %v1582 = vunpack.c.l.b16 %v430
    %v1583 = vunpack.c.h.b16 %v430
    %v1584 = vunpack.c.l.b16 %v431
    %v1585 = vunpack.c.h.b16 %v431
    %v1586 = vunpack.c.l.b16 %v432
    %v1587 = vunpack.c.h.b16 %v432
    %v1588 = vunpack.c.l.b16 %v433
    %v1589 = vunpack.c.h.b16 %v433
    %v1590 = vunpack.c.l.b16 %v434
    %v1591 = vunpack.c.h.b16 %v434
    %v1592 = vunpack.c.l.b16 %v435
    %v1593 = vunpack.c.h.b16 %v435
    %v1594 = vunpack.c.l.b16 %v436
    %v1595 = vunpack.c.h.b16 %v436
    %v1596 = vunpack.c.l.b16 %v437
    %v1597 = vunpack.c.h.b16 %v437
    %v1598 = vunpack.c.l.b16 %v438
    %v1599 = vunpack.c.h.b16 %v438
    %v1600 = vunpack.c.l.b16 %v439
    %v1601 = vunpack.c.h.b16 %v439
    %v1602 = vunpack.c.l.b16 %v440
    %v1603 = vunpack.c.h.b16 %v440
    %v1604 = vunpack.c.l.b16 %v441
    %v1605 = vunpack.c.h.b16 %v441
    %v1606 = vunpack.c.l.b16 %v442
    %v1607 = vunpack.c.h.b16 %v442
    %v1608 = vunpack.c.l.b16 %v443
    %v1609 = vunpack.c.h.b16 %v443
    %v1610 = vunpack.c.l.b16 %v444
    %v1611 = vunpack.c.h.b16 %v444
    %v1612 = vunpack.c.l.b16 %v445
    %v1613 = vunpack.c.h.b16 %v445
    %v1614 = vunpack.c.l.b16 %v446
    %v1615 = vunpack.c.h.b16 %v446
    %v1616 = vunpack.c.l.b16 %v447
    %v1617 = vunpack.c.h.b16 %v447
    %v1618 = vunpack.c.l.b16 %v448
    %v1619 = vunpack.c.h.b16 %v448
    %v1620 = vunpack.c.l.b16 %v449
    %v1621 = vunpack.c.h.b16 %v449
    %v1622 = vunpack.c.l.b16 %v450
    %v1623 = vunpack.c.h.b16 %v450
    %v1624 = vunpack.c.l.b16 %v451
    %v1625 = vunpack.c.h.b16 %v451
    %v1626 = vunpack.c.l.b16 %v452
    %v1627 = vunpack.c.h.b16 %v452
    %v1628 = vunpack.c.l.b16 %v453
    %v1629 = vunpack.c.h.b16 %v453
    %v1630 = vunpack.c.l.b16 %v454
    %v1631 = vunpack.c.h.b16 %v454
    %v1632 = vunpack.c.l.b16 %v455
    %v1633 = vunpack.c.h.b16 %v455
    %v1634 = vunpack.c.l.b16 %v456
    %v1635 = vunpack.c.h.b16 %v456
    %v1636 = vunpack.c.l.b16 %v457
    %v1637 = vunpack.c.h.b16 %v457
    %v1638 = vunpack.c.l.b16 %v458
    %v1639 = vunpack.c.h.b16 %v458
    %v1640 = vunpack.c.l.b16 %v459
    %v1641 = vunpack.c.h.b16 %v459
    %v1642 = vunpack.c.l.b16 %v460
    %v1643 = vunpack.c.h.b16 %v460
    %v1644 = vunpack.c.l.b16 %v461
    %v1645 = vunpack.c.h.b16 %v461
    %v1646 = vpack.c.b16 %v884, %v878
    %v1647 = vpack.c.b16 %v885, %v879
    %v1648 = vpack.c.b16 %v886, %v880
    %v1649 = vpack.c.b16 %v887, %v881
    %v1650 = vpack.c.b16 %v888, %v882
    %v1651 = vpack.c.b16 %v889, %v883
    %v1652 = vpack.c.b16 %v896, %v890
    %v1653 = vpack.c.b16 %v897, %v891
    %v1654 = vpack.c.b16 %v898, %v892
    %v1655 = vpack.c.b16 %v899, %v893
    %v1656 = vpack.c.b16 %v900, %v894
    %v1657 = vpack.c.b16 %v901, %v895
    %v1658 = vpack.c.b16 %v908, %v902
    %v1659 = vpack.c.b16 %v909, %v903
    %v1660 = vpack.c.b16 %v910, %v904
    %v1661 = vpack.c.b16 %v911, %v905
    %v1662 = vpack.c.b16 %v912, %v906
    %v1663 = vpack.c.b16 %v913, %v907
    %v1664 = vpack.c.b16 %v920, %v914
    %v1665 = vpack.c.b16 %v921, %v915
    %v1666 = vpack.c.b16 %v922, %v916
    %v1667 = vpack.c.b16 %v923, %v917
    %v1668 = vpack.c.b16 %v924, %v918
    %v1669 = vpack.c.b16 %v925, %v919
    %v1670 = vpack.c.b16 %v932, %v926
    %v1671 = vpack.c.b16 %v933, %v927
    %v1672 = vpack.c.b16 %v934, %v928
    %v1673 = vpack.c.b16 %v935, %v929
    %v1674 = vpack.c.b16 %v936, %v930
    %v1675 = vpack.c.b16 %v937, %v931
    %v1676 = vpack.c.b16 %v944, %v938
    %v1677 = vpack.c.b16 %v945, %v939
    %v1678 = vpack.c.b16 %v946, %v940
    %v1679 = vpack.c.b16 %v947, %v941
    %v1680 = vpack.c.b16 %v948, %v942
    %v1681 = vpack.c.b16 %v949, %v943
    %v1682 = vpack.c.b16 %v956, %v950
    %v1683 = vpack.c.b16 %v957, %v951
    %v1684 = vpack.c.b16 %v958, %v952
    %v1685 = vpack.c.b16 %v959, %v953
    %v1686 = vpack.c.b16 %v960, %v954
    %v1687 = vpack.c.b16 %v961, %v955
    %v1688 = vpack.c.b16 %v968, %v962
    %v1689 = vpack.c.b16 %v969, %v963
    %v1690 = vpack.c.b16 %v970, %v964
    %v1691 = vpack.c.b16 %v971, %v965
    %v1692 = vpack.c.b16 %v972, %v966
    %v1693 = vpack.c.b16 %v973, %v967
    %v1694 = vpack.c.b16 %v980, %v974
    %v1695 = vpack.c.b16 %v981, %v975
    %v1696 = vpack.c.b16 %v982, %v976
    %v1697 = vpack.c.b16 %v983, %v977
    %v1698 = vpack.c.b16 %v984, %v978
    %v1699 = vpack.c.b16 %v985, %v979
    %v1700 = vpack.c.b16 %v992, %v986
    %v1701 = vpack.c.b16 %v993, %v987
    %v1702 = vpack.c.b16 %v994, %v988
    %v1703 = vpack.c.b16 %v995, %v989
    %v1704 = vpack.c.b16 %v996, %v990
    %v1705 = vpack.c.b16 %v997, %v991
    %v1706 = vpack.c.b16 %v1004, %v998
    %v1707 = vpack.c.b16 %v1005, %v999
    %v1708 = vpack.c.b16 %v1006, %v1000
    %v1709 = vpack.c.b16 %v1007, %v1001
    %v1710 = vpack.c.b16 %v1008, %v1002
    %v1711 = vpack.c.b16 %v1009, %v1003
    %v1712 = vpack.c.b16 %v1016, %v1010
    %v1713 = vpack.c.b16 %v1017, %v1011
    %v1714 = vpack.c.b16 %v1018, %v1012
    %v1715 = vpack.c.b16 %v1019, %v1013
    %v1716 = vpack.c.b16 %v1020, %v1014
    %v1717 = vpack.c.b16 %v1021, %v1015
    %v1718 = vpack.c.b16 %v1028, %v1022
    %v1719 = vpack.c.b16 %v1029, %v1023
    %v1720 = vpack.c.b16 %v1030, %v1024
    %v1721 = vpack.c.b16 %v1031, %v1025
    %v1722 = vpack.c.b16 %v1032, %v1026
    %v1723 = vpack.c.b16 %v1033, %v1027
    %v1724 = vpack.c.b16 %v1040, %v1034
    %v1725 = vpack.c.b16 %v1041, %v1035
    %v1726 = vpack.c.b16 %v1042, %v1036
    %v1727 = vpack.c.b16 %v1043, %v1037
    %v1728 = vpack.c.b16 %v1044, %v1038
    %v1729 = vpack.c.b16 %v1045, %v1039
    %v1730 = vpack.c.b16 %v1052, %v1046
    %v1731 = vpack.c.b16 %v1053, %v1047
    %v1732 = vpack.c.b16 %v1054, %v1048
    %v1733 = vpack.c.b16 %v1055, %v1049
    %v1734 = vpack.c.b16 %v1056, %v1050
    %v1735 = vpack.c.b16 %v1057, %v1051
    %v1736 = vpack.c.b16 %v1064, %v1058
    %v1737 = vpack.c.b16 %v1065, %v1059
    %v1738 = vpack.c.b16 %v1066, %v1060
    %v1739 = vpack.c.b16 %v1067, %v1061
    %v1740 = vpack.c.b16 %v1068, %v1062
    %v1741 = vpack.c.b16 %v1069, %v1063
    %v1742 = vpack.c.b16 %v1076, %v1070
    %v1743 = vpack.c.b16 %v1077, %v1071
    %v1744 = vpack.c.b16 %v1078, %v1072
    %v1745 = vpack.c.b16 %v1079, %v1073
    %v1746 = vpack.c.b16 %v1080, %v1074
    %v1747 = vpack.c.b16 %v1081, %v1075
    %v1748 = vpack.c.b16 %v1088, %v1082
    %v1749 = vpack.c.b16 %v1089, %v1083
    %v1750 = vpack.c.b16 %v1090, %v1084
    %v1751 = vpack.c.b16 %v1091, %v1085
    %v1752 = vpack.c.b16 %v1092, %v1086
    %v1753 = vpack.c.b16 %v1093, %v1087
    %v1754 = vpack.c.b16 %v1100, %v1094
    %v1755 = vpack.c.b16 %v1101, %v1095
    %v1756 = vpack.c.b16 %v1102, %v1096
    %v1757 = vpack.c.b16 %v1103, %v1097
    %v1758 = vpack.c.b16 %v1104, %v1098
    %v1759 = vpack.c.b16 %v1105, %v1099
    %v1760 = vpack.c.b16 %v1112, %v1106
    %v1761 = vpack.c.b16 %v1113, %v1107
    %v1762 = vpack.c.b16 %v1114, %v1108
    %v1763 = vpack.c.b16 %v1115, %v1109
    %v1764 = vpack.c.b16 %v1116, %v1110
    %v1765 = vpack.c.b16 %v1117, %v1111
    %v1766 = vpack.c.b16 %v1124, %v1118
    %v1767 = vpack.c.b16 %v1125, %v1119
    %v1768 = vpack.c.b16 %v1126, %v1120
    %v1769 = vpack.c.b16 %v1127, %v1121
    %v1770 = vpack.c.b16 %v1128, %v1122
    %v1771 = vpack.c.b16 %v1129, %v1123
    %v1772 = vpack.c.b16 %v1136, %v1130
    %v1773 = vpack.c.b16 %v1137, %v1131
    %v1774 = vpack.c.b16 %v1138, %v1132
    %v1775 = vpack.c.b16 %v1139, %v1133
    %v1776 = vpack.c.b16 %v1140, %v1134
    %v1777 = vpack.c.b16 %v1141, %v1135
    %v1778 = vpack.c.b16 %v1148, %v1142
    %v1779 = vpack.c.b16 %v1149, %v1143
    %v1780 = vpack.c.b16 %v1150, %v1144
    %v1781 = vpack.c.b16 %v1151, %v1145
    %v1782 = vpack.c.b16 %v1152, %v1146
    %v1783 = vpack.c.b16 %v1153, %v1147
    %v1784 = vpack.c.b16 %v1160, %v1154
    %v1785 = vpack.c.b16 %v1161, %v1155
    %v1786 = vpack.c.b16 %v1162, %v1156
    %v1787 = vpack.c.b16 %v1163, %v1157
    %v1788 = vpack.c.b16 %v1164, %v1158
    %v1789 = vpack.c.b16 %v1165, %v1159
    %v1790 = vpack.c.b16 %v1172, %v1166
    %v1791 = vpack.c.b16 %v1173, %v1167
    %v1792 = vpack.c.b16 %v1174, %v1168
    %v1793 = vpack.c.b16 %v1175, %v1169
    %v1794 = vpack.c.b16 %v1176, %v1170
    %v1795 = vpack.c.b16 %v1177, %v1171
    %v1796 = vpack.c.b16 %v1184, %v1178
    %v1797 = vpack.c.b16 %v1185, %v1179
    %v1798 = vpack.c.b16 %v1186, %v1180
    %v1799 = vpack.c.b16 %v1187, %v1181
    %v1800 = vpack.c.b16 %v1188, %v1182
    %v1801 = vpack.c.b16 %v1189, %v1183
    %v1802 = vpack.c.b16 %v1196, %v1190
    %v1803 = vpack.c.b16 %v1197, %v1191
    %v1804 = vpack.c.b16 %v1198, %v1192
    %v1805 = vpack.c.b16 %v1199, %v1193
    %v1806 = vpack.c.b16 %v1200, %v1194
    %v1807 = vpack.c.b16 %v1201, %v1195
    %v1808 = vpack.c.b16 %v1208, %v1202
    %v1809 = vpack.c.b16 %v1209, %v1203
    %v1810 = vpack.c.b16 %v1210, %v1204
    %v1811 = vpack.c.b16 %v1211, %v1205
    %v1812 = vpack.c.b16 %v1212, %v1206
    %v1813 = vpack.c.b16 %v1213, %v1207
    %v1814 = vpack.c.b16 %v1220, %v1214
    %v1815 = vpack.c.b16 %v1221, %v1215
    %v1816 = vpack.c.b16 %v1222, %v1216
    %v1817 = vpack.c.b16 %v1223, %v1217
    %v1818 = vpack.c.b16 %v1224, %v1218
    %v1819 = vpack.c.b16 %v1225, %v1219
    %v1820 = vpack.c.b16 %v1232, %v1226
    %v1821 = vpack.c.b16 %v1233, %v1227
    %v1822 = vpack.c.b16 %v1234, %v1228
    %v1823 = vpack.c.b16 %v1235, %v1229
    %v1824 = vpack.c.b16 %v1236, %v1230
    %v1825 = vpack.c.b16 %v1237, %v1231
    %v1826 = vpack.c.b16 %v1244, %v1238
    %v1827 = vpack.c.b16 %v1245, %v1239
    %v1828 = vpack.c.b16 %v1246, %v1240
    %v1829 = vpack.c.b16 %v1247, %v1241
    %v1830 = vpack.c.b16 %v1248, %v1242
    %v1831 = vpack.c.b16 %v1249, %v1243
    %v1832 = vpack.c.b16 %v1256, %v1250
    %v1833 = vpack.c.b16 %v1257, %v1251
    %v1834 = vpack.c.b16 %v1258, %v1252
    %v1835 = vpack.c.b16 %v1259, %v1253
    %v1836 = vpack.c.b16 %v1260, %v1254
    %v1837 = vpack.c.b16 %v1261, %v1255
    %v1838 = vpack.c.b16 %v1268, %v1262
    %v1839 = vpack.c.b16 %v1269, %v1263
    %v1840 = vpack.c.b16 %v1270, %v1264
    %v1841 = vpack.c.b16 %v1271, %v1265
    %v1842 = vpack.c.b16 %v1272, %v1266
    %v1843 = vpack.c.b16 %v1273, %v1267
    %v1844 = vpack.c.b16 %v1280, %v1274
    %v1845 = vpack.c.b16 %v1281, %v1275
    %v1846 = vpack.c.b16 %v1282, %v1276
    %v1847 = vpack.c.b16 %v1283, %v1277
    %v1848 = vpack.c.b16 %v1284, %v1278
    %v1849 = vpack.c.b16 %v1285, %v1279
    %v1850 = vpack.c.b16 %v1292, %v1286
    %v1851 = vpack.c.b16 %v1293, %v1287
    %v1852 = vpack.c.b16 %v1294, %v1288
    %v1853 = vpack.c.b16 %v1295, %v1289
    %v1854 = vpack.c.b16 %v1296, %v1290
    %v1855 = vpack.c.b16 %v1297, %v1291
    %v1856 = vpack.c.b16 %v1304, %v1298
    %v1857 = vpack.c.b16 %v1305, %v1299
    %v1858 = vpack.c.b16 %v1306, %v1300
    %v1859 = vpack.c.b16 %v1307, %v1301
    %v1860 = vpack.c.b16 %v1308, %v1302
    %v1861 = vpack.c.b16 %v1309, %v1303
    %v1862 = vpack.c.b16 %v1316, %v1310
    %v1863 = vpack.c.b16 %v1317, %v1311
    %v1864 = vpack.c.b16 %v1318, %v1312
    %v1865 = vpack.c.b16 %v1319, %v1313
    %v1866 = vpack.c.b16 %v1320, %v1314
    %v1867 = vpack.c.b16 %v1321, %v1315
    %v1868 = vpack.c.b16 %v1328, %v1322
    %v1869 = vpack.c.b16 %v1329, %v1323
    %v1870 = vpack.c.b16 %v1330, %v1324
    %v1871 = vpack.c.b16 %v1331, %v1325
    %v1872 = vpack.c.b16 %v1332, %v1326
    %v1873 = vpack.c.b16 %v1333, %v1327
    %v1874 = vpack.c.b16 %v1340, %v1334
    %v1875 = vpack.c.b16 %v1341, %v1335
    %v1876 = vpack.c.b16 %v1342, %v1336
    %v1877 = vpack.c.b16 %v1343, %v1337
    %v1878 = vpack.c.b16 %v1344, %v1338
    %v1879 = vpack.c.b16 %v1345, %v1339
    %v1880 = vpack.c.b16 %v1352, %v1346
    %v1881 = vpack.c.b16 %v1353, %v1347
    %v1882 = vpack.c.b16 %v1354, %v1348
    %v1883 = vpack.c.b16 %v1355, %v1349
    %v1884 = vpack.c.b16 %v1356, %v1350
    %v1885 = vpack.c.b16 %v1357, %v1351
    %v1886 = vpack.c.b16 %v1364, %v1358
    %v1887 = vpack.c.b16 %v1365, %v1359
    %v1888 = vpack.c.b16 %v1366, %v1360
    %v1889 = vpack.c.b16 %v1367, %v1361
    %v1890 = vpack.c.b16 %v1368, %v1362
    %v1891 = vpack.c.b16 %v1369, %v1363
    %v1892 = vpack.c.b16 %v1376, %v1370
    %v1893 = vpack.c.b16 %v1377, %v1371
    %v1894 = vpack.c.b16 %v1378, %v1372
    %v1895 = vpack.c.b16 %v1379, %v1373
    %v1896 = vpack.c.b16 %v1380, %v1374
    %v1897 = vpack.c.b16 %v1381, %v1375
    %v1898 = vpack.c.b16 %v1388, %v1382
    %v1899 = vpack.c.b16 %v1389, %v1383
    %v1900 = vpack.c.b16 %v1390, %v1384
    %v1901 = vpack.c.b16 %v1391, %v1385
    %v1902 = vpack.c.b16 %v1392, %v1386
    %v1903 = vpack.c.b16 %v1393, %v1387
    %v1904 = vpack.c.b16 %v1400, %v1394
    %v1905 = vpack.c.b16 %v1401, %v1395
    %v1906 = vpack.c.b16 %v1402, %v1396
    %v1907 = vpack.c.b16 %v1403, %v1397
    %v1908 = vpack.c.b16 %v1404, %v1398
    %v1909 = vpack.c.b16 %v1405, %v1399
    %v1910 = vpack.c.b16 %v1412, %v1406
    %v1911 = vpack.c.b16 %v1413, %v1407
    %v1912 = vpack.c.b16 %v1414, %v1408
    %v1913 = vpack.c.b16 %v1415, %v1409
    %v1914 = vpack.c.b16 %v1416, %v1410
    %v1915 = vpack.c.b16 %v1417, %v1411
    %v1916 = vpack.c.b16 %v1424, %v1418
    %v1917 = vpack.c.b16 %v1425, %v1419
    %v1918 = vpack.c.b16 %v1426, %v1420
    %v1919 = vpack.c.b16 %v1427, %v1421
    %v1920 = vpack.c.b16 %v1428, %v1422
    %v1921 = vpack.c.b16 %v1429, %v1423
    %v1922 = vpack.c.b16 %v1436, %v1430
    %v1923 = vpack.c.b16 %v1437, %v1431
    %v1924 = vpack.c.b16 %v1438, %v1432
    %v1925 = vpack.c.b16 %v1439, %v1433
    %v1926 = vpack.c.b16 %v1440, %v1434
    %v1927 = vpack.c.b16 %v1441, %v1435
    %v1928 = vpack.c.b16 %v1448, %v1442
    %v1929 = vpack.c.b16 %v1449, %v1443
    %v1930 = vpack.c.b16 %v1450, %v1444
    %v1931 = vpack.c.b16 %v1451, %v1445
    %v1932 = vpack.c.b16 %v1452, %v1446
    %v1933 = vpack.c.b16 %v1453, %v1447
    %v1934 = vpack.c.b16 %v1460, %v1454
    %v1935 = vpack.c.b16 %v1461, %v1455
    %v1936 = vpack.c.b16 %v1462, %v1456
    %v1937 = vpack.c.b16 %v1463, %v1457
    %v1938 = vpack.c.b16 %v1464, %v1458
    %v1939 = vpack.c.b16 %v1465, %v1459
    %v1940 = vpack.c.b16 %v1472, %v1466
    %v1941 = vpack.c.b16 %v1473, %v1467
    %v1942 = vpack.c.b16 %v1474, %v1468
    %v1943 = vpack.c.b16 %v1475, %v1469
    %v1944 = vpack.c.b16 %v1476, %v1470
    %v1945 = vpack.c.b16 %v1477, %v1471
    %v1946 = vpack.c.b16 %v1484, %v1478
    %v1947 = vpack.c.b16 %v1485, %v1479
    %v1948 = vpack.c.b16 %v1486, %v1480
    %v1949 = vpack.c.b16 %v1487, %v1481
    %v1950 = vpack.c.b16 %v1488, %v1482
    %v1951 = vpack.c.b16 %v1489, %v1483
    %v1952 = vpack.c.b16 %v1496, %v1490
    %v1953 = vpack.c.b16 %v1497, %v1491
    %v1954 = vpack.c.b16 %v1498, %v1492
    %v1955 = vpack.c.b16 %v1499, %v1493
    %v1956 = vpack.c.b16 %v1500, %v1494
    %v1957 = vpack.c.b16 %v1501, %v1495
    %v1958 = vpack.c.b16 %v1508, %v1502
    %v1959 = vpack.c.b16 %v1509, %v1503
    %v1960 = vpack.c.b16 %v1510, %v1504
    %v1961 = vpack.c.b16 %v1511, %v1505
    %v1962 = vpack.c.b16 %v1512, %v1506
    %v1963 = vpack.c.b16 %v1513, %v1507
    %v1964 = vpack.c.b16 %v1520, %v1514
    %v1965 = vpack.c.b16 %v1521, %v1515
    %v1966 = vpack.c.b16 %v1522, %v1516
    %v1967 = vpack.c.b16 %v1523, %v1517
    %v1968 = vpack.c.b16 %v1524, %v1518
    %v1969 = vpack.c.b16 %v1525, %v1519
    %v1970 = vpack.c.b16 %v1532, %v1526
    %v1971 = vpack.c.b16 %v1533, %v1527
    %v1972 = vpack.c.b16 %v1534, %v1528
    %v1973 = vpack.c.b16 %v1535, %v1529
    %v1974 = vpack.c.b16 %v1536, %v1530
    %v1975 = vpack.c.b16 %v1537, %v1531
    %v1976 = vpack.c.b16 %v1544, %v1538
    %v1977 = vpack.c.b16 %v1545, %v1539
    %v1978 = vpack.c.b16 %v1546, %v1540
    %v1979 = vpack.c.b16 %v1547, %v1541
    %v1980 = vpack.c.b16 %v1548, %v1542
    %v1981 = vpack.c.b16 %v1549, %v1543
    %v1982 = vpack.c.b16 %v1556, %v1550
    %v1983 = vpack.c.b16 %v1557, %v1551
    %v1984 = vpack.c.b16 %v1558, %v1552
    %v1985 = vpack.c.b16 %v1559, %v1553
    %v1986 = vpack.c.b16 %v1560, %v1554
    %v1987 = vpack.c.b16 %v1561, %v1555
    %v1988 = vpack.c.b16 %v1568, %v1562
    %v1989 = vpack.c.b16 %v1569, %v1563
    %v1990 = vpack.c.b16 %v1570, %v1564
    %v1991 = vpack.c.b16 %v1571, %v1565
    %v1992 = vpack.c.b16 %v1572, %v1566
    %v1993 = vpack.c.b16 %v1573, %v1567
    %v1994 = vpack.c.b16 %v1580, %v1574
    %v1995 = vpack.c.b16 %v1581, %v1575
    %v1996 = vpack.c.b16 %v1582, %v1576
    %v1997 = vpack.c.b16 %v1583, %v1577
    %v1998 = vpack.c.b16 %v1584, %v1578
    %v1999 = vpack.c.b16 %v1585, %v1579
    %v2000 = vpack.c.b16 %v1592, %v1586
    %v2001 = vpack.c.b16 %v1593, %v1587
    %v2002 = vpack.c.b16 %v1594, %v1588
    %v2003 = vpack.c.b16 %v1595, %v1589
    %v2004 = vpack.c.b16 %v1596, %v1590
    %v2005 = vpack.c.b16 %v1597, %v1591
    %v2006 = vpack.c.b16 %v1604, %v1598
    %v2007 = vpack.c.b16 %v1605, %v1599
    %v2008 = vpack.c.b16 %v1606, %v1600
    %v2009 = vpack.c.b16 %v1607, %v1601
    %v2010 = vpack.c.b16 %v1608, %v1602
    %v2011 = vpack.c.b16 %v1609, %v1603
    %v2012 = vpack.c.b16 %v1616, %v1610
    %v2013 = vpack.c.b16 %v1617, %v1611
    %v2014 = vpack.c.b16 %v1618, %v1612
    %v2015 = vpack.c.b16 %v1619, %v1613
    %v2016 = vpack.c.b16 %v1620, %v1614
    %v2017 = vpack.c.b16 %v1621, %v1615
    %v2018 = vpack.c.b16 %v1628, %v1622
    %v2019 = vpack.c.b16 %v1629, %v1623
    %v2020 = vpack.c.b16 %v1630, %v1624
    %v2021 = vpack.c.b16 %v1631, %v1625
    %v2022 = vpack.c.b16 %v1632, %v1626
    %v2023 = vpack.c.b16 %v1633, %v1627
    %v2024 = vpack.c.b16 %v1640, %v1634
    %v2025 = vpack.c.b16 %v1641, %v1635
    %v2026 = vpack.c.b16 %v1642, %v1636
    %v2027 = vpack.c.b16 %v1643, %v1637
    %v2028 = vpack.c.b16 %v1644, %v1638
    %v2029 = vpack.c.b16 %v1645, %v1639
    %2414 = vmatprep.subr.bf16.mxu0 %v1647
    %2415 = vmatpush1.bf16.msra.mxu0 %v1646
    %2416 = vmatprep.subr.bf16.mxu0 %v1653
    %2417 = vmatpush1.bf16.msra.mxu0 %v1652
    %2418 = vmatprep.subr.bf16.mxu0 %v1659
    %2419 = vmatpush1.bf16.msra.mxu0 %v1658
    %2420 = vmatprep.subr.bf16.mxu0 %v1665
    %2421 = vmatpush1.bf16.msra.mxu0 %v1664
    %2422 = vmatprep.subr.bf16.mxu0 %v1671
    %2423 = vmatpush1.bf16.msra.mxu0 %v1670
    %2424 = vmatprep.subr.bf16.mxu0 %v1677
    %2425 = vmatpush1.bf16.msra.mxu0 %v1676
    %2426 = vmatprep.subr.bf16.mxu0 %v1683
    %2427 = vmatpush1.bf16.msra.mxu0 %v1682
    %2428 = vmatprep.subr.bf16.mxu0 %v1689
    %2429 = vmatpush1.bf16.msra.mxu0 %v1688
    %2430 = vmatprep.subr.bf16.mxu0 %v1695
    %2431 = vmatpush1.bf16.msra.mxu0 %v1694
    %2432 = vmatprep.subr.bf16.mxu0 %v1701
    %2433 = vmatpush1.bf16.msra.mxu0 %v1700
    %2434 = vmatprep.subr.bf16.mxu0 %v1707
    %2435 = vmatpush1.bf16.msra.mxu0 %v1706
    %2436 = vmatprep.subr.bf16.mxu0 %v1713
    %2437 = vmatpush1.bf16.msra.mxu0 %v1712
    %2438 = vmatprep.subr.bf16.mxu0 %v1719
    %2439 = vmatpush1.bf16.msra.mxu0 %v1718
    %2440 = vmatprep.subr.bf16.mxu0 %v1725
    %2441 = vmatpush1.bf16.msra.mxu0 %v1724
    %2442 = vmatprep.subr.bf16.mxu0 %v1731
    %2443 = vmatpush1.bf16.msra.mxu0 %v1730
    %2444 = vmatprep.subr.bf16.mxu0 %v1737
    %2445 = vmatpush1.bf16.msra.mxu0 %v1736
    %2446 = vmatprep.mubr.bf16.mxu0 %v71
    %2447 = vmatmul.mubr.bf16.gmra.mrb[0].mxu0 %v70
    %v2448 = vpop.f32.mrb[0].mxu0
    %v2449 = vadd.f32 %v467, %v2448
    %v2450 = vpop.f32.mrb[0].mxu0
    %v2451 = vadd.f32 %v471, %v2450
    %v2452 = vpop.f32.mrb[0].mxu0
    %v2453 = vadd.f32 %v467, %v2452
    %v2454 = vpop.f32.mrb[0].mxu0
    %v2455 = vadd.f32 %v471, %v2454
    %2456 = vdwg.mxu0
    %2457 = vmatprep.subr.bf16.mxu0 %v1743
    %2458 = vmatpush1.bf16.msra.mxu0 %v1742
    %2459 = vmatprep.subr.bf16.mxu0 %v1749
    %2460 = vmatpush1.bf16.msra.mxu0 %v1748
    %2461 = vmatprep.subr.bf16.mxu0 %v1755
    %2462 = vmatpush1.bf16.msra.mxu0 %v1754
    %2463 = vmatprep.subr.bf16.mxu0 %v1761
    %2464 = vmatpush1.bf16.msra.mxu0 %v1760
    %2465 = vmatprep.subr.bf16.mxu0 %v1767
    %2466 = vmatpush1.bf16.msra.mxu0 %v1766
    %2467 = vmatprep.subr.bf16.mxu0 %v1773
    %2468 = vmatpush1.bf16.msra.mxu0 %v1772
    %2469 = vmatprep.subr.bf16.mxu0 %v1779
    %2470 = vmatpush1.bf16.msra.mxu0 %v1778
    %2471 = vmatprep.subr.bf16.mxu0 %v1785
    %2472 = vmatpush1.bf16.msra.mxu0 %v1784
    %2473 = vmatprep.subr.bf16.mxu0 %v1791
    %2474 = vmatpush1.bf16.msra.mxu0 %v1790
    %2475 = vmatprep.subr.bf16.mxu0 %v1797
    %2476 = vmatpush1.bf16.msra.mxu0 %v1796
    %2477 = vmatprep.subr.bf16.mxu0 %v1803
    %2478 = vmatpush1.bf16.msra.mxu0 %v1802
    %2479 = vmatprep.subr.bf16.mxu0 %v1809
    %2480 = vmatpush1.bf16.msra.mxu0 %v1808
    %2481 = vmatprep.subr.bf16.mxu0 %v1815
    %2482 = vmatpush1.bf16.msra.mxu0 %v1814
    %2483 = vmatprep.subr.bf16.mxu0 %v1821
    %2484 = vmatpush1.bf16.msra.mxu0 %v1820
    %2485 = vmatprep.subr.bf16.mxu0 %v1827
    %2486 = vmatpush1.bf16.msra.mxu0 %v1826
    %2487 = vmatprep.subr.bf16.mxu0 %v1833
    %2488 = vmatpush1.bf16.msra.mxu0 %v1832
    %2489 = vmatprep.mubr.bf16.mxu0 %v73
    %2490 = vmatmul.mubr.bf16.gmra.mrb[0].mxu0 %v72
    %v2491 = vpop.f32.mrb[0].mxu0
    %v2492 = vadd.f32 %v2449, %v2491
    %v2493 = vpop.f32.mrb[0].mxu0
    %v2494 = vadd.f32 %v2451, %v2493
    %v2495 = vpop.f32.mrb[0].mxu0
    %v2496 = vadd.f32 %v2453, %v2495
    %v2497 = vpop.f32.mrb[0].mxu0
    %v2498 = vadd.f32 %v2455, %v2497
    %2499 = vdwg.mxu0
    %2500 = vmatprep.subr.bf16.mxu0 %v1839
    %2501 = vmatpush1.bf16.msra.mxu0 %v1838
    %2502 = vmatprep.subr.bf16.mxu0 %v1845
    %2503 = vmatpush1.bf16.msra.mxu0 %v1844
    %2504 = vmatprep.subr.bf16.mxu0 %v1851
    %2505 = vmatpush1.bf16.msra.mxu0 %v1850
    %2506 = vmatprep.subr.bf16.mxu0 %v1857
    %2507 = vmatpush1.bf16.msra.mxu0 %v1856
    %2508 = vmatprep.subr.bf16.mxu0 %v1863
    %2509 = vmatpush1.bf16.msra.mxu0 %v1862
    %2510 = vmatprep.subr.bf16.mxu0 %v1869
    %2511 = vmatpush1.bf16.msra.mxu0 %v1868
    %2512 = vmatprep.subr.bf16.mxu0 %v1875
    %2513 = vmatpush1.bf16.msra.mxu0 %v1874
    %2514 = vmatprep.subr.bf16.mxu0 %v1881
    %2515 = vmatpush1.bf16.msra.mxu0 %v1880
    %2516 = vmatprep.subr.bf16.mxu0 %v1887
    %2517 = vmatpush1.bf16.msra.mxu0 %v1886
    %2518 = vmatprep.subr.bf16.mxu0 %v1893
    %2519 = vmatpush1.bf16.msra.mxu0 %v1892
    %2520 = vmatprep.subr.bf16.mxu0 %v1899
    %2521 = vmatpush1.bf16.msra.mxu0 %v1898
    %2522 = vmatprep.subr.bf16.mxu0 %v1905
    %2523 = vmatpush1.bf16.msra.mxu0 %v1904
    %2524 = vmatprep.subr.bf16.mxu0 %v1911
    %2525 = vmatpush1.bf16.msra.mxu0 %v1910
    %2526 = vmatprep.subr.bf16.mxu0 %v1917
    %2527 = vmatpush1.bf16.msra.mxu0 %v1916
    %2528 = vmatprep.subr.bf16.mxu0 %v1923
    %2529 = vmatpush1.bf16.msra.mxu0 %v1922
    %2530 = vmatprep.subr.bf16.mxu0 %v1929
    %2531 = vmatpush1.bf16.msra.mxu0 %v1928
    %2532 = vmatprep.mubr.bf16.mxu0 %v75
    %2533 = vmatmul.mubr.bf16.gmra.mrb[0].mxu0 %v74
    %v2534 = vpop.f32.mrb[0].mxu0
    %v2535 = vadd.f32 %v2492, %v2534
    %v2536 = vpop.f32.mrb[0].mxu0
    %v2537 = vadd.f32 %v2494, %v2536
    %v2538 = vpop.f32.mrb[0].mxu0
    %v2539 = vadd.f32 %v2496, %v2538
    %v2540 = vpop.f32.mrb[0].mxu0
    %v2541 = vadd.f32 %v2498, %v2540
    %2542 = vdwg.mxu0
    %2543 = vmatprep.subr.bf16.mxu0 %v1935
    %2544 = vmatpush1.bf16.msra.mxu0 %v1934
    %2545 = vmatprep.subr.bf16.mxu0 %v1941
    %2546 = vmatpush1.bf16.msra.mxu0 %v1940
    %2547 = vmatprep.subr.bf16.mxu0 %v1947
    %2548 = vmatpush1.bf16.msra.mxu0 %v1946
    %2549 = vmatprep.subr.bf16.mxu0 %v1953
    %2550 = vmatpush1.bf16.msra.mxu0 %v1952
    %2551 = vmatprep.subr.bf16.mxu0 %v1959
    %2552 = vmatpush1.bf16.msra.mxu0 %v1958
    %2553 = vmatprep.subr.bf16.mxu0 %v1965
    %2554 = vmatpush1.bf16.msra.mxu0 %v1964
    %2555 = vmatprep.subr.bf16.mxu0 %v1971
    %2556 = vmatpush1.bf16.msra.mxu0 %v1970
    %2557 = vmatprep.subr.bf16.mxu0 %v1977
    %2558 = vmatpush1.bf16.msra.mxu0 %v1976
    %2559 = vmatprep.subr.bf16.mxu0 %v1983
    %2560 = vmatpush1.bf16.msra.mxu0 %v1982
    %2561 = vmatprep.subr.bf16.mxu0 %v1989
    %2562 = vmatpush1.bf16.msra.mxu0 %v1988
    %2563 = vmatprep.subr.bf16.mxu0 %v1995
    %2564 = vmatpush1.bf16.msra.mxu0 %v1994
    %2565 = vmatprep.subr.bf16.mxu0 %v2001
    %2566 = vmatpush1.bf16.msra.mxu0 %v2000
    %2567 = vmatprep.subr.bf16.mxu0 %v2007
    %2568 = vmatpush1.bf16.msra.mxu0 %v2006
    %2569 = vmatprep.subr.bf16.mxu0 %v2013
    %2570 = vmatpush1.bf16.msra.mxu0 %v2012
    %2571 = vmatprep.subr.bf16.mxu0 %v2019
    %2572 = vmatpush1.bf16.msra.mxu0 %v2018
    %2573 = vmatprep.subr.bf16.mxu0 %v2025
    %2574 = vmatpush1.bf16.msra.mxu0 %v2024
    %2575 = vmatprep.mubr.bf16.mxu0 %v77
    %2576 = vmatmul.mubr.bf16.gmra.mrb[0].mxu0 %v76
    %v2577 = vpop.f32.mrb[0].mxu0
    %v2578 = vadd.f32 %v2535, %v2577
    %v2579 = vpop.f32.mrb[0].mxu0
    %v2580 = vadd.f32 %v2537, %v2579
    %v2581 = vpop.f32.mrb[0].mxu0
    %v2582 = vadd.f32 %v2539, %v2581
    %v2583 = vpop.f32.mrb[0].mxu0
    %v2584 = vadd.f32 %v2541, %v2583
    %2585 = vdwg.mxu0
    %2586 = vmatprep.subr.bf16.mxu0 %v1649
    %2587 = vmatpush1.bf16.msra.mxu0 %v1648
    %2588 = vmatprep.subr.bf16.mxu0 %v1655
    %2589 = vmatpush1.bf16.msra.mxu0 %v1654
    %2590 = vmatprep.subr.bf16.mxu0 %v1661
    %2591 = vmatpush1.bf16.msra.mxu0 %v1660
    %2592 = vmatprep.subr.bf16.mxu0 %v1667
    %2593 = vmatpush1.bf16.msra.mxu0 %v1666
    %2594 = vmatprep.subr.bf16.mxu0 %v1673
    %2595 = vmatpush1.bf16.msra.mxu0 %v1672
    %2596 = vmatprep.subr.bf16.mxu0 %v1679
    %2597 = vmatpush1.bf16.msra.mxu0 %v1678
    %2598 = vmatprep.subr.bf16.mxu0 %v1685
    %2599 = vmatpush1.bf16.msra.mxu0 %v1684
    %2600 = vmatprep.subr.bf16.mxu0 %v1691
    %2601 = vmatpush1.bf16.msra.mxu0 %v1690
    %2602 = vmatprep.subr.bf16.mxu0 %v1697
    %2603 = vmatpush1.bf16.msra.mxu0 %v1696
    %2604 = vmatprep.subr.bf16.mxu0 %v1703
    %2605 = vmatpush1.bf16.msra.mxu0 %v1702
    %2606 = vmatprep.subr.bf16.mxu0 %v1709
    %2607 = vmatpush1.bf16.msra.mxu0 %v1708
    %2608 = vmatprep.subr.bf16.mxu0 %v1715
    %2609 = vmatpush1.bf16.msra.mxu0 %v1714
    %2610 = vmatprep.subr.bf16.mxu0 %v1721
    %2611 = vmatpush1.bf16.msra.mxu0 %v1720
    %2612 = vmatprep.subr.bf16.mxu0 %v1727
    %2613 = vmatpush1.bf16.msra.mxu0 %v1726
    %2614 = vmatprep.subr.bf16.mxu0 %v1733
    %2615 = vmatpush1.bf16.msra.mxu0 %v1732
    %2616 = vmatprep.subr.bf16.mxu0 %v1739
    %2617 = vmatpush1.bf16.msra.mxu0 %v1738
    %2618 = vmatprep.mubr.bf16.mxu0 %v71
    %2619 = vmatmul.mubr.bf16.gmra.mrb[0].mxu0 %v70
    %v2620 = vpop.f32.mrb[0].mxu0
    %v2621 = vadd.f32 %v475, %v2620
    %v2622 = vpop.f32.mrb[0].mxu0
    %v2623 = vadd.f32 %v479, %v2622
    %v2624 = vpop.f32.mrb[0].mxu0
    %v2625 = vadd.f32 %v475, %v2624
    %v2626 = vpop.f32.mrb[0].mxu0
    %v2627 = vadd.f32 %v479, %v2626
    %2628 = vdwg.mxu0
    %2629 = vmatprep.subr.bf16.mxu0 %v1745
    %2630 = vmatpush1.bf16.msra.mxu0 %v1744
    %2631 = vmatprep.subr.bf16.mxu0 %v1751
    %2632 = vmatpush1.bf16.msra.mxu0 %v1750
    %2633 = vmatprep.subr.bf16.mxu0 %v1757
    %2634 = vmatpush1.bf16.msra.mxu0 %v1756
    %2635 = vmatprep.subr.bf16.mxu0 %v1763
    %2636 = vmatpush1.bf16.msra.mxu0 %v1762
    %2637 = vmatprep.subr.bf16.mxu0 %v1769
    %2638 = vmatpush1.bf16.msra.mxu0 %v1768
    %2639 = vmatprep.subr.bf16.mxu0 %v1775
    %2640 = vmatpush1.bf16.msra.mxu0 %v1774
    %2641 = vmatprep.subr.bf16.mxu0 %v1781
    %2642 = vmatpush1.bf16.msra.mxu0 %v1780
    %2643 = vmatprep.subr.bf16.mxu0 %v1787
    %2644 = vmatpush1.bf16.msra.mxu0 %v1786
    %2645 = vmatprep.subr.bf16.mxu0 %v1793
    %2646 = vmatpush1.bf16.msra.mxu0 %v1792
    %2647 = vmatprep.subr.bf16.mxu0 %v1799
    %2648 = vmatpush1.bf16.msra.mxu0 %v1798
    %2649 = vmatprep.subr.bf16.mxu0 %v1805
    %2650 = vmatpush1.bf16.msra.mxu0 %v1804
    %2651 = vmatprep.subr.bf16.mxu0 %v1811
    %2652 = vmatpush1.bf16.msra.mxu0 %v1810
    %2653 = vmatprep.subr.bf16.mxu0 %v1817
    %2654 = vmatpush1.bf16.msra.mxu0 %v1816
    %2655 = vmatprep.subr.bf16.mxu0 %v1823
    %2656 = vmatpush1.bf16.msra.mxu0 %v1822
    %2657 = vmatprep.subr.bf16.mxu0 %v1829
    %2658 = vmatpush1.bf16.msra.mxu0 %v1828
    %2659 = vmatprep.subr.bf16.mxu0 %v1835
    %2660 = vmatpush1.bf16.msra.mxu0 %v1834
    %2661 = vmatprep.mubr.bf16.mxu0 %v73
    %2662 = vmatmul.mubr.bf16.gmra.mrb[0].mxu0 %v72
    %v2663 = vpop.f32.mrb[0].mxu0
    %v2664 = vadd.f32 %v2621, %v2663
    %v2665 = vpop.f32.mrb[0].mxu0
    %v2666 = vadd.f32 %v2623, %v2665
    %v2667 = vpop.f32.mrb[0].mxu0
    %v2668 = vadd.f32 %v2625, %v2667
    %v2669 = vpop.f32.mrb[0].mxu0
    %v2670 = vadd.f32 %v2627, %v2669
    %2671 = vdwg.mxu0
    %2672 = vmatprep.subr.bf16.mxu0 %v1841
    %2673 = vmatpush1.bf16.msra.mxu0 %v1840
    %2674 = vmatprep.subr.bf16.mxu0 %v1847
    %2675 = vmatpush1.bf16.msra.mxu0 %v1846
    %2676 = vmatprep.subr.bf16.mxu0 %v1853
    %2677 = vmatpush1.bf16.msra.mxu0 %v1852
    %2678 = vmatprep.subr.bf16.mxu0 %v1859
    %2679 = vmatpush1.bf16.msra.mxu0 %v1858
    %2680 = vmatprep.subr.bf16.mxu0 %v1865
    %2681 = vmatpush1.bf16.msra.mxu0 %v1864
    %2682 = vmatprep.subr.bf16.mxu0 %v1871
    %2683 = vmatpush1.bf16.msra.mxu0 %v1870
    %2684 = vmatprep.subr.bf16.mxu0 %v1877
    %2685 = vmatpush1.bf16.msra.mxu0 %v1876
    %2686 = vmatprep.subr.bf16.mxu0 %v1883
    %2687 = vmatpush1.bf16.msra.mxu0 %v1882
    %2688 = vmatprep.subr.bf16.mxu0 %v1889
    %2689 = vmatpush1.bf16.msra.mxu0 %v1888
    %2690 = vmatprep.subr.bf16.mxu0 %v1895
    %2691 = vmatpush1.bf16.msra.mxu0 %v1894
    %2692 = vmatprep.subr.bf16.mxu0 %v1901
    %2693 = vmatpush1.bf16.msra.mxu0 %v1900
    %2694 = vmatprep.subr.bf16.mxu0 %v1907
    %2695 = vmatpush1.bf16.msra.mxu0 %v1906
    %2696 = vmatprep.subr.bf16.mxu0 %v1913
    %2697 = vmatpush1.bf16.msra.mxu0 %v1912
    %2698 = vmatprep.subr.bf16.mxu0 %v1919
    %2699 = vmatpush1.bf16.msra.mxu0 %v1918
    %2700 = vmatprep.subr.bf16.mxu0 %v1925
    %2701 = vmatpush1.bf16.msra.mxu0 %v1924
    %2702 = vmatprep.subr.bf16.mxu0 %v1931
    %2703 = vmatpush1.bf16.msra.mxu0 %v1930
    %2704 = vmatprep.mubr.bf16.mxu0 %v75
    %2705 = vmatmul.mubr.bf16.gmra.mrb[0].mxu0 %v74
    %v2706 = vpop.f32.mrb[0].mxu0
    %v2707 = vadd.f32 %v2664, %v2706
    %v2708 = vpop.f32.mrb[0].mxu0
    %v2709 = vadd.f32 %v2666, %v2708
    %v2710 = vpop.f32.mrb[0].mxu0
    %v2711 = vadd.f32 %v2668, %v2710
    %v2712 = vpop.f32.mrb[0].mxu0
    %v2713 = vadd.f32 %v2670, %v2712
    %2714 = vdwg.mxu0
    %2715 = vmatprep.subr.bf16.mxu0 %v1937
    %2716 = vmatpush1.bf16.msra.mxu0 %v1936
    %2717 = vmatprep.subr.bf16.mxu0 %v1943
    %2718 = vmatpush1.bf16.msra.mxu0 %v1942
    %2719 = vmatprep.subr.bf16.mxu0 %v1949
    %2720 = vmatpush1.bf16.msra.mxu0 %v1948
    %2721 = vmatprep.subr.bf16.mxu0 %v1955
    %2722 = vmatpush1.bf16.msra.mxu0 %v1954
    %2723 = vmatprep.subr.bf16.mxu0 %v1961
    %2724 = vmatpush1.bf16.msra.mxu0 %v1960
    %2725 = vmatprep.subr.bf16.mxu0 %v1967
    %2726 = vmatpush1.bf16.msra.mxu0 %v1966
    %2727 = vmatprep.subr.bf16.mxu0 %v1973
    %2728 = vmatpush1.bf16.msra.mxu0 %v1972
    %2729 = vmatprep.subr.bf16.mxu0 %v1979
    %2730 = vmatpush1.bf16.msra.mxu0 %v1978
    %2731 = vmatprep.subr.bf16.mxu0 %v1985
    %2732 = vmatpush1.bf16.msra.mxu0 %v1984
    %2733 = vmatprep.subr.bf16.mxu0 %v1991
    %2734 = vmatpush1.bf16.msra.mxu0 %v1990
    %2735 = vmatprep.subr.bf16.mxu0 %v1997
    %2736 = vmatpush1.bf16.msra.mxu0 %v1996
    %2737 = vmatprep.subr.bf16.mxu0 %v2003
    %2738 = vmatpush1.bf16.msra.mxu0 %v2002
    %2739 = vmatprep.subr.bf16.mxu0 %v2009
    %2740 = vmatpush1.bf16.msra.mxu0 %v2008
    %2741 = vmatprep.subr.bf16.mxu0 %v2015
    %2742 = vmatpush1.bf16.msra.mxu0 %v2014
    %2743 = vmatprep.subr.bf16.mxu0 %v2021
    %2744 = vmatpush1.bf16.msra.mxu0 %v2020
    %2745 = vmatprep.subr.bf16.mxu0 %v2027
    %2746 = vmatpush1.bf16.msra.mxu0 %v2026
    %2747 = vmatprep.mubr.bf16.mxu0 %v77
    %2748 = vmatmul.mubr.bf16.gmra.mrb[0].mxu0 %v76
    %v2749 = vpop.f32.mrb[0].mxu0
    %v2750 = vadd.f32 %v2707, %v2749
    %v2751 = vpop.f32.mrb[0].mxu0
    %v2752 = vadd.f32 %v2709, %v2751
    %v2753 = vpop.f32.mrb[0].mxu0
    %v2754 = vadd.f32 %v2711, %v2753
    %v2755 = vpop.f32.mrb[0].mxu0
    %v2756 = vadd.f32 %v2713, %v2755
    %2757 = vdwg.mxu0
    %2758 = vmatprep.subr.bf16.mxu0 %v1651
    %2759 = vmatpush1.bf16.msra.mxu0 %v1650
    %2760 = vmatprep.subr.bf16.mxu0 %v1657
    %2761 = vmatpush1.bf16.msra.mxu0 %v1656
    %2762 = vmatprep.subr.bf16.mxu0 %v1663
    %2763 = vmatpush1.bf16.msra.mxu0 %v1662
    %2764 = vmatprep.subr.bf16.mxu0 %v1669
    %2765 = vmatpush1.bf16.msra.mxu0 %v1668
    %2766 = vmatprep.subr.bf16.mxu0 %v1675
    %2767 = vmatpush1.bf16.msra.mxu0 %v1674
    %2768 = vmatprep.subr.bf16.mxu0 %v1681
    %2769 = vmatpush1.bf16.msra.mxu0 %v1680
    %2770 = vmatprep.subr.bf16.mxu0 %v1687
    %2771 = vmatpush1.bf16.msra.mxu0 %v1686
    %2772 = vmatprep.subr.bf16.mxu0 %v1693
    %2773 = vmatpush1.bf16.msra.mxu0 %v1692
    %2774 = vmatprep.subr.bf16.mxu0 %v1699
    %2775 = vmatpush1.bf16.msra.mxu0 %v1698
    %2776 = vmatprep.subr.bf16.mxu0 %v1705
    %2777 = vmatpush1.bf16.msra.mxu0 %v1704
    %2778 = vmatprep.subr.bf16.mxu0 %v1711
    %2779 = vmatpush1.bf16.msra.mxu0 %v1710
    %2780 = vmatprep.subr.bf16.mxu0 %v1717
    %2781 = vmatpush1.bf16.msra.mxu0 %v1716
    %2782 = vmatprep.subr.bf16.mxu0 %v1723
    %2783 = vmatpush1.bf16.msra.mxu0 %v1722
    %2784 = vmatprep.subr.bf16.mxu0 %v1729
    %2785 = vmatpush1.bf16.msra.mxu0 %v1728
    %2786 = vmatprep.subr.bf16.mxu0 %v1735
    %2787 = vmatpush1.bf16.msra.mxu0 %v1734
    %2788 = vmatprep.subr.bf16.mxu0 %v1741
    %2789 = vmatpush1.bf16.msra.mxu0 %v1740
    %2790 = vmatprep.mubr.bf16.mxu0 %v71
    %2791 = vmatmul.mubr.bf16.gmra.mrb[0].mxu0 %v70
    %v2792 = vpop.f32.mrb[0].mxu0
    %v2793 = vadd.f32 %v483, %v2792
    %v2794 = vpop.f32.mrb[0].mxu0
    %v2795 = vadd.f32 %v487, %v2794
    %v2796 = vpop.f32.mrb[0].mxu0
    %v2797 = vadd.f32 %v483, %v2796
    %v2798 = vpop.f32.mrb[0].mxu0
    %v2799 = vadd.f32 %v487, %v2798
    %2800 = vdwg.mxu0
    %2801 = vmatprep.subr.bf16.mxu0 %v1747
    %2802 = vmatpush1.bf16.msra.mxu0 %v1746
    %2803 = vmatprep.subr.bf16.mxu0 %v1753
    %2804 = vmatpush1.bf16.msra.mxu0 %v1752
    %2805 = vmatprep.subr.bf16.mxu0 %v1759
    %2806 = vmatpush1.bf16.msra.mxu0 %v1758
    %2807 = vmatprep.subr.bf16.mxu0 %v1765
    %2808 = vmatpush1.bf16.msra.mxu0 %v1764
    %2809 = vmatprep.subr.bf16.mxu0 %v1771
    %2810 = vmatpush1.bf16.msra.mxu0 %v1770
    %2811 = vmatprep.subr.bf16.mxu0 %v1777
    %2812 = vmatpush1.bf16.msra.mxu0 %v1776
    %2813 = vmatprep.subr.bf16.mxu0 %v1783
    %2814 = vmatpush1.bf16.msra.mxu0 %v1782
    %2815 = vmatprep.subr.bf16.mxu0 %v1789
    %2816 = vmatpush1.bf16.msra.mxu0 %v1788
    %2817 = vmatprep.subr.bf16.mxu0 %v1795
    %2818 = vmatpush1.bf16.msra.mxu0 %v1794
    %2819 = vmatprep.subr.bf16.mxu0 %v1801
    %2820 = vmatpush1.bf16.msra.mxu0 %v1800
    %2821 = vmatprep.subr.bf16.mxu0 %v1807
    %2822 = vmatpush1.bf16.msra.mxu0 %v1806
    %2823 = vmatprep.subr.bf16.mxu0 %v1813
    %2824 = vmatpush1.bf16.msra.mxu0 %v1812
    %2825 = vmatprep.subr.bf16.mxu0 %v1819
    %2826 = vmatpush1.bf16.msra.mxu0 %v1818
    %2827 = vmatprep.subr.bf16.mxu0 %v1825
    %2828 = vmatpush1.bf16.msra.mxu0 %v1824
    %2829 = vmatprep.subr.bf16.mxu0 %v1831
    %2830 = vmatpush1.bf16.msra.mxu0 %v1830
    %2831 = vmatprep.subr.bf16.mxu0 %v1837
    %2832 = vmatpush1.bf16.msra.mxu0 %v1836
    %2833 = vmatprep.mubr.bf16.mxu0 %v73
    %2834 = vmatmul.mubr.bf16.gmra.mrb[0].mxu0 %v72
    %v2835 = vpop.f32.mrb[0].mxu0
    %v2836 = vadd.f32 %v2793, %v2835
    %v2837 = vpop.f32.mrb[0].mxu0
    %v2838 = vadd.f32 %v2795, %v2837
    %v2839 = vpop.f32.mrb[0].mxu0
    %v2840 = vadd.f32 %v2797, %v2839
    %v2841 = vpop.f32.mrb[0].mxu0
    %v2842 = vadd.f32 %v2799, %v2841
    %2843 = vdwg.mxu0
    %2844 = vmatprep.subr.bf16.mxu0 %v1843
    %2845 = vmatpush1.bf16.msra.mxu0 %v1842
    %2846 = vmatprep.subr.bf16.mxu0 %v1849
    %2847 = vmatpush1.bf16.msra.mxu0 %v1848
    %2848 = vmatprep.subr.bf16.mxu0 %v1855
    %2849 = vmatpush1.bf16.msra.mxu0 %v1854
    %2850 = vmatprep.subr.bf16.mxu0 %v1861
    %2851 = vmatpush1.bf16.msra.mxu0 %v1860
    %2852 = vmatprep.subr.bf16.mxu0 %v1867
    %2853 = vmatpush1.bf16.msra.mxu0 %v1866
    %2854 = vmatprep.subr.bf16.mxu0 %v1873
    %2855 = vmatpush1.bf16.msra.mxu0 %v1872
    %2856 = vmatprep.subr.bf16.mxu0 %v1879
    %2857 = vmatpush1.bf16.msra.mxu0 %v1878
    %2858 = vmatprep.subr.bf16.mxu0 %v1885
    %2859 = vmatpush1.bf16.msra.mxu0 %v1884
    %2860 = vmatprep.subr.bf16.mxu0 %v1891
    %2861 = vmatpush1.bf16.msra.mxu0 %v1890
    %2862 = vmatprep.subr.bf16.mxu0 %v1897
    %2863 = vmatpush1.bf16.msra.mxu0 %v1896
    %2864 = vmatprep.subr.bf16.mxu0 %v1903
    %2865 = vmatpush1.bf16.msra.mxu0 %v1902
    %2866 = vmatprep.subr.bf16.mxu0 %v1909
    %2867 = vmatpush1.bf16.msra.mxu0 %v1908
    %2868 = vmatprep.subr.bf16.mxu0 %v1915
    %2869 = vmatpush1.bf16.msra.mxu0 %v1914
    %2870 = vmatprep.subr.bf16.mxu0 %v1921
    %2871 = vmatpush1.bf16.msra.mxu0 %v1920
    %2872 = vmatprep.subr.bf16.mxu0 %v1927
    %2873 = vmatpush1.bf16.msra.mxu0 %v1926
    %2874 = vmatprep.subr.bf16.mxu0 %v1933
    %2875 = vmatpush1.bf16.msra.mxu0 %v1932
    %2876 = vmatprep.mubr.bf16.mxu0 %v75
    %2877 = vmatmul.mubr.bf16.gmra.mrb[0].mxu0 %v74
    %v2878 = vpop.f32.mrb[0].mxu0
    %v2879 = vadd.f32 %v2836, %v2878
    %v2880 = vpop.f32.mrb[0].mxu0
    %v2881 = vadd.f32 %v2838, %v2880
    %v2882 = vpop.f32.mrb[0].mxu0
    %v2883 = vadd.f32 %v2840, %v2882
    %v2884 = vpop.f32.mrb[0].mxu0
    %v2885 = vadd.f32 %v2842, %v2884
    %2886 = vdwg.mxu0
    %2887 = vmatprep.subr.bf16.mxu0 %v1939
    %2888 = vmatpush1.bf16.msra.mxu0 %v1938
    %2889 = vmatprep.subr.bf16.mxu0 %v1945
    %2890 = vmatpush1.bf16.msra.mxu0 %v1944
    %2891 = vmatprep.subr.bf16.mxu0 %v1951
    %2892 = vmatpush1.bf16.msra.mxu0 %v1950
    %2893 = vmatprep.subr.bf16.mxu0 %v1957
    %2894 = vmatpush1.bf16.msra.mxu0 %v1956
    %2895 = vmatprep.subr.bf16.mxu0 %v1963
    %2896 = vmatpush1.bf16.msra.mxu0 %v1962
    %2897 = vmatprep.subr.bf16.mxu0 %v1969
    %2898 = vmatpush1.bf16.msra.mxu0 %v1968
    %2899 = vmatprep.subr.bf16.mxu0 %v1975
    %2900 = vmatpush1.bf16.msra.mxu0 %v1974
    %2901 = vmatprep.subr.bf16.mxu0 %v1981
    %2902 = vmatpush1.bf16.msra.mxu0 %v1980
    %2903 = vmatprep.subr.bf16.mxu0 %v1987
    %2904 = vmatpush1.bf16.msra.mxu0 %v1986
    %2905 = vmatprep.subr.bf16.mxu0 %v1993
    %2906 = vmatpush1.bf16.msra.mxu0 %v1992
    %2907 = vmatprep.subr.bf16.mxu0 %v1999
    %2908 = vmatpush1.bf16.msra.mxu0 %v1998
    %2909 = vmatprep.subr.bf16.mxu0 %v2005
    %2910 = vmatpush1.bf16.msra.mxu0 %v2004
    %2911 = vmatprep.subr.bf16.mxu0 %v2011
    %2912 = vmatpush1.bf16.msra.mxu0 %v2010
    %2913 = vmatprep.subr.bf16.mxu0 %v2017
    %2914 = vmatpush1.bf16.msra.mxu0 %v2016
    %2915 = vmatprep.subr.bf16.mxu0 %v2023
    %2916 = vmatpush1.bf16.msra.mxu0 %v2022
    %2917 = vmatprep.subr.bf16.mxu0 %v2029
    %2918 = vmatpush1.bf16.msra.mxu0 %v2028
    %2919 = vmatprep.mubr.bf16.mxu0 %v77
    %2920 = vmatmul.mubr.bf16.gmra.mrb[0].mxu0 %v76
    %v2921 = vpop.f32.mrb[0].mxu0
    %v2922 = vadd.f32 %v2879, %v2921
    %v2923 = vpop.f32.mrb[0].mxu0
    %v2924 = vadd.f32 %v2881, %v2923
    %v2925 = vpop.f32.mrb[0].mxu0
    %v2926 = vadd.f32 %v2883, %v2925
    %v2927 = vpop.f32.mrb[0].mxu0
    %v2928 = vadd.f32 %v2885, %v2927
    %2929 = vdwg.mxu0
    %2930 = vst [vmem:[#allocation8] sm:$0xff] %v2578
    %2931 = vst [vmem:[#allocation8 + $0x8] sm:$0xff] %v2580
    %2932 = vst [vmem:[#allocation8 + $0x10] sm:$0xff] %v2750
    %2933 = vst [vmem:[#allocation8 + $0x18] sm:$0xff] %v2752
    %2934 = vst [vmem:[#allocation8 + $0x20] sm:$0xff] %v2922
    %2935 = vst [vmem:[#allocation8 + $0x28] sm:$0xff] %v2924
    %2936 = vst [vmem:[#allocation8 + $0x30] sm:$0xff] %v2582
    %2937 = vst [vmem:[#allocation8 + $0x38] sm:$0xff] %v2584
    %2938 = vst [vmem:[#allocation8 + $0x40] sm:$0xff] %v2754
    %2939 = vst [vmem:[#allocation8 + $0x48] sm:$0xff] %v2756
    %2940 = vst [vmem:[#allocation8 + $0x50] sm:$0xff] %v2926
    %2941 = vst [vmem:[#allocation8 + $0x58] sm:$0xff] %v2928
    // Predicated region
    $region26: #{tpu_custom_call.1} parent=1 // pred_check
      _
    $region27: #{tpu_custom_call.1} parent=1 // pred_check_branch
      %2943 = sbr.rel (0) target = $region29
    $region28: #{tpu_custom_call.1} parent=1 // pred_region
      %s2945 = ssub.s32 1536, 1536
      %2946 = vsyncadd [#allocation4], %s2945
      %s2947 = sshll.u32 [#allocation8], 4
      %s2948 = int_to_ptr.vmem [resolvable:$true] %s2947
      %2953 = dma.vmem_to_hbm [thread:$0]  %s2948, 1536, %s3, [#allocation4], 768, 768, 48
    $region29: #{tpu_custom_call.1} parent=1 // pred_fallthru
      _
    // Predicated region
    $region30: #{tpu_custom_call.1} parent=1 // pred_check
      _
    $region31: #{tpu_custom_call.1} parent=1 // pred_check_branch
      %2955 = sbr.rel (0) target = $region33
    $region32: #{tpu_custom_call.1} parent=1 // pred_region
      %2956 = dma.done [#allocation4], 1536
    $region33: #{tpu_custom_call.1} parent=1 // pred_fallthru
      _
    %2957 = vsyncpa [#allocation3], 1
    %2958 = vsyncpa [#allocation6], 1
    %2959 = vsyncpa [#allocation4], 1

</llo_original>
